<compile_context>
chip_gen: v7x
topology: tpu7x:2x2x1
jax: 0.10.0
libtpu: 0.0.40
codegen_flags: <defaults>
</compile_context>

<pallas_src>
import numpy as np

import jax
import jax.numpy as jnp
from jax import lax
from jax.experimental import pallas as pl
from jax.experimental.pallas import tpu as pltpu


# ----------------------------------------------------------------------------
# Kernel 1: fused GCN layer 1 (+ layer-2 "support" matmul), tiled over adj
# ----------------------------------------------------------------------------

def gcn_layer1_kernel(adj_ref, x_ref, w1_ref, b1_ref, w2_ref, s2_ref, acc_ref):
    """Grid = (row tiles i, k tiles). Per (i,k): acc += adj[i,k] @ x[k]; at the
    last k: support2[i] = relu(acc @ W1 + b1) @ W2.

    NOTE: (adj @ x) @ W1 == adj @ (x @ W1); this ordering avoids recomputing the
    x@W1 "support" once per adj row-tile.  If nfeat >> nhid, precompute
    support1 = x @ W1 in a small separate gridded call instead.
    """
    k = pl.program_id(1)

    @pl.when(k == 0)
    def _():
        acc_ref[...] = jnp.zeros_like(acc_ref)

    acc_ref[...] += jnp.dot(adj_ref[...], x_ref[...],
                            preferred_element_type=jnp.float32)

    @pl.when(k == pl.num_programs(1) - 1)
    def _():
        h1 = jnp.dot(acc_ref[...].astype(jnp.bfloat16), w1_ref[...],
                     preferred_element_type=jnp.float32)
        h1 = jnp.maximum(h1 + b1_ref[...], 0.0)          # relu(adj @ (x@W1) + b1)
        # dropout = 0 -> identity
        s2_ref[...] = jnp.dot(h1.astype(jnp.bfloat16), w2_ref[...],
                              preferred_element_type=jnp.float32
                              ).astype(s2_ref.dtype)


def gcn_layer1_support2(adj, x, w1, b1, w2, *, tm=128, tk=128):
    n = adj.shape[0]
    nfeat = x.shape[1]
    nhid = w1.shape[1]
    nout = w2.shape[1]
    assert n % tm == 0 and n % tk == 0

    flops = 2 * n * n * nfeat + 2 * n * nfeat * nhid + 2 * n * nhid * nout
    bytes_acc = 2 * (n * n + n * nfeat + nfeat * nhid + nhid * nout + n * nout) + 4 * nhid

    return pl.pallas_call(
        gcn_layer1_kernel,
        out_shape=jax.ShapeDtypeStruct((n, nout), jnp.bfloat16),
        grid_spec=pltpu.PrefetchScalarGridSpec(
            num_scalar_prefetch=0,
            grid=(n // tm, n // tk),
            in_specs=[
                pl.BlockSpec((tm, tk), lambda i, k: (i, k)),        # adj tile
                pl.BlockSpec((tk, nfeat), lambda i, k: (k, 0)),     # entity features
                pl.BlockSpec((nfeat, nhid), lambda i, k: (0, 0)),   # W1 (pinned)
                pl.BlockSpec((1, nhid), lambda i, k: (0, 0)),       # b1 (pinned)
                pl.BlockSpec((nhid, nout), lambda i, k: (0, 0)),    # W2 (pinned)
            ],
            out_specs=pl.BlockSpec((tm, nout), lambda i, k: (i, 0)),
            scratch_shapes=[pltpu.VMEM((tm, nfeat), jnp.float32)],
        ),
        compiler_params=pltpu.CompilerParams(
            dimension_semantics=("parallel", "arbitrary")),
        cost_estimate=pl.CostEstimate(flops=flops, transcendentals=0,
                                      bytes_accessed=bytes_acc),
    )(adj, x, w1, b1, w2)


# ----------------------------------------------------------------------------
# Kernel 2: fused tail — row-restricted GCN layer 2 + bert surrogate + joint fc
# ----------------------------------------------------------------------------

def tail_kernel(adjsel_ref, s2_ref, b2_ref, tok_ref, mask_ref,
                bw_ref, bb_ref, fcw_ref, fcb_ref, out_ref, gacc_ref):
    """Grid = (k tiles over N).  Per k: gacc += adj[eids, k] @ support2[k].
    At the last k, finish layer 2, the BERT surrogate and the joint fc."""
    k = pl.program_id(0)

    @pl.when(k == 0)
    def _():
        gacc_ref[...] = jnp.zeros_like(gacc_ref)

    gacc_ref[...] += jnp.dot(adjsel_ref[...], s2_ref[...],
                             preferred_element_type=jnp.float32)

    @pl.when(k == pl.num_programs(0) - 1)
    def _():
        gph = gacc_ref[...] + b2_ref[...]                            # [B, nout] == gph_emb[eids]

        # ---- bert surrogate: masked mean pool (mask pre-scaled by 1/count) ----
        mask = mask_ref[...]                                         # [B, L] f32
        inv_cnt = pl.reciprocal(
            jnp.maximum(jnp.sum(mask, axis=1, keepdims=True), 1.0), approx=True)
        w = mask * inv_cnt                                           # [B, L]
        pooled = jnp.sum(tok_ref[...].astype(jnp.float32) * w[:, :, None], axis=1)
        dcb = jnp.dot(pooled.astype(jnp.bfloat16), bw_ref[...],
                      preferred_element_type=jnp.float32) + bb_ref[...]

        # ---- F.normalize(p=2, dim=1, eps=1e-12) via rsqrt row scale ----
        def l2norm(v):
            ss = jnp.sum(v * v, axis=1, keepdims=True)
            return v * lax.rsqrt(jnp.maximum(ss, 1e-24))             # == v / max(||v||, 1e-12)

        joint_in = jnp.concatenate([l2norm(dcb), l2norm(gph)], axis=1)
        out_ref[...] = (
            jnp.dot(joint_in.astype(jnp.bfloat16), fcw_ref[...],
                    preferred_element_type=jnp.float32) + fcb_ref[...]
        ).astype(out_ref.dtype)


def fused_tail(adj_sel, support2, b2, tok_emb, mask, bert_w, bert_b,
               fc_w, fc_b, *, tk=128):
    bsz, n = adj_sel.shape
    nout = support2.shape[1]
    seq_len, h = tok_emb.shape[1], tok_emb.shape[2]
    d_out = fc_w.shape[1]
    assert n % tk == 0

    return pl.pallas_call(
        tail_kernel,
        out_shape=jax.ShapeDtypeStruct((bsz, d_out), jnp.float32),
        grid_spec=pltpu.PrefetchScalarGridSpec(
            num_scalar_prefetch=0,
            grid=(n // tk,),
            in_specs=[
                pl.BlockSpec((bsz, tk), lambda k: (0, k)),           # adj[eids, :] tile
                pl.BlockSpec((tk, nout), lambda k: (k, 0)),          # support2 tile
                pl.BlockSpec((1, nout), lambda k: (0, 0)),           # b2 (pinned)
                pl.BlockSpec((bsz, seq_len, h), lambda k: (0, 0, 0)),  # token embeddings
                pl.BlockSpec((bsz, seq_len), lambda k: (0, 0)),      # attention mask
                pl.BlockSpec((h, d_out), lambda k: (0, 0)),          # bert_w
                pl.BlockSpec((1, d_out), lambda k: (0, 0)),          # bert_b
                pl.BlockSpec((d_out + nout, d_out), lambda k: (0, 0)),  # fc W.T (concat)
                pl.BlockSpec((1, d_out), lambda k: (0, 0)),          # fc bias
            ],
            out_specs=pl.BlockSpec((bsz, d_out), lambda k: (0, 0)),
            scratch_shapes=[pltpu.VMEM((bsz, nout), jnp.float32)],
        ),
        compiler_params=pltpu.CompilerParams(
            dimension_semantics=("arbitrary",)),
    )(adj_sel, support2, b2, tok_emb, mask, bert_w, bert_b, fc_w, fc_b)


# ----------------------------------------------------------------------------
# Adjacency construction (dense reproduction of get_adjr(..., norm=True))
# ----------------------------------------------------------------------------

def build_norm_adj(ent_num, triples):
    A = np.zeros((ent_num, ent_num), dtype=np.float32)
    M = {}
    for h, _, t in triples:
        if h == t:
            continue
        M[(h, t)] = M.get((h, t), 0) + 1
    for (h, t), v in M.items():
        A[h, t] += v
        A[t, h] += v
    for i in range(ent_num):
        A[i, i] += 1.0
    # normalize_adj: D^{-1/2} A^T D^{-1/2} (A symmetric here)
    rowsum = A.sum(1)
    with np.errstate(divide="ignore"):
        r_inv_sqrt = np.power(rowsum, -0.5)
    r_inv_sqrt[np.isinf(r_inv_sqrt)] = 0.0
    D = np.diag(r_inv_sqrt).astype(np.float32)
    return ((A @ D).T @ D).astype(np.float32)


# ----------------------------------------------------------------------------
# combine_model forward (gathers in plain JAX, everything else in 2 Pallas calls)
# ----------------------------------------------------------------------------

def combine_model_forward(params, batch_word_list, attention_mask, eids):
    # token embedding lookup for the BERT surrogate (XLA gather)
    tok_emb = jnp.take(params["vocab_emb"], batch_word_list, axis=0)   # [B, L, H] bf16
    mask = attention_mask.astype(jnp.float32)                          # [B, L]

    # GCN layer 1 fused with the layer-2 "support" matmul (tiled over adj)
    support2 = gcn_layer1_support2(
        params["adj"], params["entity_emb"],
        params["gc1_w"], params["gc1_b"], params["gc2_w"])             # [N, nout] bf16

    # GCN layer 2 restricted to the rows actually consumed: gph_emb[eids]
    # (only B rows of adj are needed; the full N x N layer-2 product is skipped)
    adj_sel = jnp.take(params["adj"], eids, axis=0)                    # [B, N] bf16

    joint = fused_tail(adj_sel, support2, params["gc2_b"], tok_emb, mask,
                       params["bert_w"], params["bert_b"],
                       params["fc_w"], params["fc_b"])                 # [B, D_out] f32
    return joint


# ----------------------------------------------------------------------------
# Deterministic parameter construction
# ----------------------------------------------------------------------------

def init_params(key, ent_num, nfeat, nhid, nout, model_out_dim, vocab, bert_hidden,
                triples):
    ks = jax.random.split(key, 10)

    def uni(k, shape, bound):
        return jax.random.uniform(k, shape, jnp.float32, -bound, bound)

    # entity features (stands in for the loaded .npy basic features)
    entity_emb = jax.random.normal(ks[0], (ent_num, nfeat), jnp.float32)

    # GraphConvolution reset_parameters: uniform(-1/sqrt(out), 1/sqrt(out))
    gc1_w = uni(ks[1], (nfeat, nhid), 1.0 / np.sqrt(nhid))
    gc1_b = uni(ks[2], (1, nhid), 1.0 / np.sqrt(nhid))
    gc2_w = uni(ks[3], (nhid, nout), 1.0 / np.sqrt(nout))
    gc2_b = uni(ks[4], (1, nout), 1.0 / np.sqrt(nout))

    # surrogate bert params
    vocab_emb = jax.random.normal(ks[5], (vocab, bert_hidden), jnp.float32) * 0.02
    bert_w = uni(ks[6], (bert_hidden, model_out_dim), 1.0 / np.sqrt(bert_hidden))
    bert_b = uni(ks[7], (1, model_out_dim), 1.0 / np.sqrt(bert_hidden))

    # fc: Linear(model_out_dim + nout, model_out_dim); stored as one W.T block:
    # rows [0:model_out_dim] multiply l2norm(dcb), rows [model_out_dim:] l2norm(gph)
    fan_in = model_out_dim + nout
    fc_wT = uni(ks[8], (fan_in, model_out_dim), 1.0 / np.sqrt(fan_in))
    fc_b = uni(ks[9], (1, model_out_dim), 1.0 / np.sqrt(fan_in))

    adj = jnp.asarray(build_norm_adj(ent_num, triples))

    bf16 = jnp.bfloat16
    return {
        # bf16 matmul operands (f32 accumulation inside the kernels), f32 biases
        "entity_emb": entity_emb.astype(bf16),
        "adj": adj.astype(bf16),
        "gc1_w": gc1_w.astype(bf16), "gc1_b": gc1_b,
        "gc2_w": gc2_w.astype(bf16), "gc2_b": gc2_b,
        "vocab_emb": vocab_emb.astype(bf16),
        "bert_w": bert_w.astype(bf16), "bert_b": bert_b,
        "fc_w": fc_wT.astype(bf16), "fc_b": fc_b,
    }


if __name__ == "__main__":
    ENT_NUM = 256
    NFEAT, NHID, NOUT = 128, 128, 128     # lane-dense (multiple of 128) feature widths
    MODEL_OUTPUT_DIM = 128
    VOCAB, BERT_HIDDEN = 100, 128
    B, L = 16, 16                         # batch of entities, tokens per entity

    # deterministic synthetic triples
    triples = [(i, 0, (i * 7 + 3) % ENT_NUM) for i in range(ENT_NUM)]

    key = jax.random.PRNGKey(0)
    pkey, dkey1, dkey2 = jax.random.split(key, 3)
    params = init_params(pkey, ENT_NUM, NFEAT, NHID, NOUT,
                         MODEL_OUTPUT_DIM, VOCAB, BERT_HIDDEN, triples)

    batch_word_list = jax.random.randint(dkey1, (B, L), 0, VOCAB, jnp.int32)
    attention_mask = (jax.random.uniform(dkey2, (B, L)) > 0.3).astype(jnp.int32)
    # guarantee at least one valid token per row
    attention_mask = attention_mask.at[:, 0].set(1)
    eids = jnp.arange(B, dtype=jnp.int32)

    fwd = jax.jit(combine_model_forward)
    out = fwd(params, batch_word_list, attention_mask, eids)
    out = jax.block_until_ready(out)
    assert out.shape == (B, MODEL_OUTPUT_DIM)
    assert bool(jnp.all(jnp.isfinite(out)))
    print("KERNEL_OK")
</pallas_src>

<mosaic_0001>
module attributes {stable_mosaic.version = 11 : i64} {
  func.func @gcn_layer1_kernel(%arg0: i32, %arg1: i32, %arg2: memref<128x128xbf16, #tpu.memory_space<vmem>>, %arg3: memref<128x128xbf16, #tpu.memory_space<vmem>>, %arg4: memref<128x128xbf16, #tpu.memory_space<vmem>>, %arg5: memref<1x128xf32, #tpu.memory_space<vmem>>, %arg6: memref<128x128xbf16, #tpu.memory_space<vmem>>, %arg7: memref<128x128xbf16, #tpu.memory_space<vmem>>, %arg8: memref<128x128xf32, #tpu.memory_space<vmem>>) attributes {dimension_semantics = [#tpu.dimension_semantics<parallel>, #tpu.dimension_semantics<arbitrary>], iteration_bounds = array<i64: 2, 2>, scalar_prefetch = 0 : i64, scratch_operands = 1 : i64, tpu.core_type = #tpu.core_type<tc>, window_params = [{transform_indices = @transform_0, window_bounds = array<i64: 128, 128>}, {transform_indices = @transform_1, window_bounds = array<i64: 128, 128>}, {pipeline_mode = #tpu.pipeline_mode<synchronous>, transform_indices = @transform_2, window_bounds = array<i64: 128, 128>}, {pipeline_mode = #tpu.pipeline_mode<synchronous>, transform_indices = @transform_3, window_bounds = array<i64: 1, 128>}, {pipeline_mode = #tpu.pipeline_mode<synchronous>, transform_indices = @transform_4, window_bounds = array<i64: 128, 128>}, {transform_indices = @transform_5, window_bounds = array<i64: 128, 128>}]} {
    %c0_i32 = arith.constant 0 : i32
    %0 = arith.cmpi eq, %arg1, %c0_i32 : i32
    %1 = arith.extui %0 : i1 to i32
    %c0_i32_0 = arith.constant 0 : i32
    %2 = arith.cmpi ne, %1, %c0_i32_0 : i32
    scf.if %2 {
      %cst_9 = arith.constant 0.000000e+00 : f32
      %12 = vector.broadcast %cst_9 : f32 to vector<128x128xf32>
      %c0_10 = arith.constant 0 : index
      %c0_11 = arith.constant 0 : index
      %13 = vector.load %arg8[%c0_10, %c0_11] : memref<128x128xf32, #tpu.memory_space<vmem>>, vector<128x128xf32>
      tpu.vector_store %arg8[%c0_10, %c0_11], %12 {strides = array<i32>} : memref<128x128xf32, #tpu.memory_space<vmem>>, vector<128x128xf32>,
    } else {
    }
    %c0 = arith.constant 0 : index
    %c0_1 = arith.constant 0 : index
    %3 = vector.load %arg8[%c0, %c0_1] : memref<128x128xf32, #tpu.memory_space<vmem>>, vector<128x128xf32>
    %c0_2 = arith.constant 0 : index
    %c0_3 = arith.constant 0 : index
    %4 = vector.load %arg2[%c0_2, %c0_3] : memref<128x128xbf16, #tpu.memory_space<vmem>>, vector<128x128xbf16>
    %c0_4 = arith.constant 0 : index
    %c0_5 = arith.constant 0 : index
    %5 = vector.load %arg3[%c0_4, %c0_5] : memref<128x128xbf16, #tpu.memory_space<vmem>>, vector<128x128xbf16>
    %cst = arith.constant dense<0.000000e+00> : vector<128x128xf32>
    %6 = tpu.matmul %4, %5, %cst {dimension_numbers = #tpu.dot_dimension_numbers<[1], [0], [0], [1], [0, 0, 1, 1], [], []>} : vector<128x128xbf16>, vector<128x128xbf16>, vector<128x128xf32> -> vector<128x128xf32>
    %7 = arith.addf %3, %6 : vector<128x128xf32>
    %c0_6 = arith.constant 0 : index
    %c0_7 = arith.constant 0 : index
    %8 = vector.load %arg8[%c0_6, %c0_7] : memref<128x128xf32, #tpu.memory_space<vmem>>, vector<128x128xf32>
    tpu.vector_store %arg8[%c0_6, %c0_7], %7 {strides = array<i32>} : memref<128x128xf32, #tpu.memory_space<vmem>>, vector<128x128xf32>,
    %c1_i32 = arith.constant 1 : i32
    %9 = arith.cmpi eq, %arg1, %c1_i32 : i32
    %10 = arith.extui %9 : i1 to i32
    %c0_i32_8 = arith.constant 0 : i32
    %11 = arith.cmpi ne, %10, %c0_i32_8 : i32
    scf.if %11 {
      %c0_9 = arith.constant 0 : index
      %c0_10 = arith.constant 0 : index
      %12 = vector.load %arg8[%c0_9, %c0_10] : memref<128x128xf32, #tpu.memory_space<vmem>>, vector<128x128xf32>
      %13 = arith.truncf %12 : vector<128x128xf32> to vector<128x128xbf16>
      %c0_11 = arith.constant 0 : index
      %c0_12 = arith.constant 0 : index
      %14 = vector.load %arg4[%c0_11, %c0_12] : memref<128x128xbf16, #tpu.memory_space<vmem>>, vector<128x128xbf16>
      %cst_13 = arith.constant dense<0.000000e+00> : vector<128x128xf32>
      %15 = tpu.matmul %13, %14, %cst_13 {dimension_numbers = #tpu.dot_dimension_numbers<[1], [0], [0], [1], [0, 0, 1, 1], [], []>} : vector<128x128xbf16>, vector<128x128xbf16>, vector<128x128xf32> -> vector<128x128xf32>
      %c0_14 = arith.constant 0 : index
      %c0_15 = arith.constant 0 : index
      %16 = vector.load %arg5[%c0_14, %c0_15] : memref<1x128xf32, #tpu.memory_space<vmem>>, vector<1x128xf32>
      %17 = vector.broadcast %16 : vector<1x128xf32> to vector<128x128xf32>
      %18 = arith.addf %15, %17 : vector<128x128xf32>
      %cst_16 = arith.constant 0.000000e+00 : f32
      %19 = vector.broadcast %cst_16 : f32 to vector<128x128xf32>
      %20 = arith.maximumf %18, %19 : vector<128x128xf32>
      %21 = arith.truncf %20 : vector<128x128xf32> to vector<128x128xbf16>
      %c0_17 = arith.constant 0 : index
      %c0_18 = arith.constant 0 : index
      %22 = vector.load %arg6[%c0_17, %c0_18] : memref<128x128xbf16, #tpu.memory_space<vmem>>, vector<128x128xbf16>
      %cst_19 = arith.constant dense<0.000000e+00> : vector<128x128xf32>
      %23 = tpu.matmul %21, %22, %cst_19 {dimension_numbers = #tpu.dot_dimension_numbers<[1], [0], [0], [1], [0, 0, 1, 1], [], []>} : vector<128x128xbf16>, vector<128x128xbf16>, vector<128x128xf32> -> vector<128x128xf32>
      %24 = arith.truncf %23 : vector<128x128xf32> to vector<128x128xbf16>
      %c0_20 = arith.constant 0 : index
      %c0_21 = arith.constant 0 : index
      %25 = vector.load %arg7[%c0_20, %c0_21] : memref<128x128xbf16, #tpu.memory_space<vmem>>, vector<128x128xbf16>
      tpu.vector_store %arg7[%c0_20, %c0_21], %24 {strides = array<i32>} : memref<128x128xbf16, #tpu.memory_space<vmem>>, vector<128x128xbf16>,
    } else {
    }
    return
  }
  func.func @transform_0(%arg0: i32, %arg1: i32) -> (i32, i32) {
    %c0_i32 = arith.constant 0 : i32
    return %arg0, %arg1 : i32, i32
  }
  func.func @transform_1(%arg0: i32, %arg1: i32) -> (i32, i32) {
    %c0_i32 = arith.constant 0 : i32
    %c0_i32_0 = arith.constant 0 : i32
    return %arg1, %c0_i32 : i32, i32
  }
  func.func @transform_2(%arg0: i32, %arg1: i32) -> (i32, i32) {
    %c0_i32 = arith.constant 0 : i32
    %c0_i32_0 = arith.constant 0 : i32
    %c0_i32_1 = arith.constant 0 : i32
    return %c0_i32, %c0_i32_0 : i32, i32
  }
  func.func @transform_3(%arg0: i32, %arg1: i32) -> (i32, i32) {
    %c0_i32 = arith.constant 0 : i32
    %c0_i32_0 = arith.constant 0 : i32
    %c0_i32_1 = arith.constant 0 : i32
    return %c0_i32, %c0_i32_0 : i32, i32
  }
  func.func @transform_4(%arg0: i32, %arg1: i32) -> (i32, i32) {
    %c0_i32 = arith.constant 0 : i32
    %c0_i32_0 = arith.constant 0 : i32
    %c0_i32_1 = arith.constant 0 : i32
    return %c0_i32, %c0_i32_0 : i32, i32
  }
  func.func @transform_5(%arg0: i32, %arg1: i32) -> (i32, i32) {
    %c0_i32 = arith.constant 0 : i32
    %c0_i32_0 = arith.constant 0 : i32
    return %arg0, %c0_i32 : i32, i32
  }
}

module attributes {stable_mosaic.version = 11 : i64} {
  func.func @tail_kernel(%arg0: i32, %arg1: memref<16x128xbf16, #tpu.memory_space<vmem>>, %arg2: memref<128x128xbf16, #tpu.memory_space<vmem>>, %arg3: memref<1x128xf32, #tpu.memory_space<vmem>>, %arg4: memref<16x16x128xbf16, #tpu.memory_space<vmem>>, %arg5: memref<16x16xf32, #tpu.memory_space<vmem>>, %arg6: memref<128x128xbf16, #tpu.memory_space<vmem>>, %arg7: memref<1x128xf32, #tpu.memory_space<vmem>>, %arg8: memref<256x128xbf16, #tpu.memory_space<vmem>>, %arg9: memref<1x128xf32, #tpu.memory_space<vmem>>, %arg10: memref<16x128xf32, #tpu.memory_space<vmem>>, %arg11: memref<16x128xf32, #tpu.memory_space<vmem>>) attributes {dimension_semantics = [#tpu.dimension_semantics<arbitrary>], iteration_bounds = array<i64: 2>, scalar_prefetch = 0 : i64, scratch_operands = 1 : i64, tpu.core_type = #tpu.core_type<tc>, window_params = [{transform_indices = @transform_0, window_bounds = array<i64: 16, 128>}, {transform_indices = @transform_1, window_bounds = array<i64: 128, 128>}, {pipeline_mode = #tpu.pipeline_mode<synchronous>, transform_indices = @transform_2, window_bounds = array<i64: 1, 128>}, {pipeline_mode = #tpu.pipeline_mode<synchronous>, transform_indices = @transform_3, window_bounds = array<i64: 16, 16, 128>}, {pipeline_mode = #tpu.pipeline_mode<synchronous>, transform_indices = @transform_4, window_bounds = array<i64: 16, 16>}, {pipeline_mode = #tpu.pipeline_mode<synchronous>, transform_indices = @transform_5, window_bounds = array<i64: 128, 128>}, {pipeline_mode = #tpu.pipeline_mode<synchronous>, transform_indices = @transform_6, window_bounds = array<i64: 1, 128>}, {pipeline_mode = #tpu.pipeline_mode<synchronous>, transform_indices = @transform_7, window_bounds = array<i64: 256, 128>}, {pipeline_mode = #tpu.pipeline_mode<synchronous>, transform_indices = @transform_8, window_bounds = array<i64: 1, 128>}, {pipeline_mode = #tpu.pipeline_mode<synchronous>, transform_indices = @transform_9, window_bounds = array<i64: 16, 128>}]} {
    %c0_i32 = arith.constant 0 : i32
    %0 = arith.cmpi eq, %arg0, %c0_i32 : i32
    %1 = arith.extui %0 : i1 to i32
    %c0_i32_0 = arith.constant 0 : i32
    %2 = arith.cmpi ne, %1, %c0_i32_0 : i32
    scf.if %2 {
      %cst_9 = arith.constant 0.000000e+00 : f32
      %12 = vector.broadcast %cst_9 : f32 to vector<16x128xf32>
      %c0_10 = arith.constant 0 : index
      %c0_11 = arith.constant 0 : index
      %13 = vector.load %arg11[%c0_10, %c0_11] : memref<16x128xf32, #tpu.memory_space<vmem>>, vector<16x128xf32>
      tpu.vector_store %arg11[%c0_10, %c0_11], %12 {strides = array<i32>} : memref<16x128xf32, #tpu.memory_space<vmem>>, vector<16x128xf32>,
    } else {
    }
    %c0 = arith.constant 0 : index
    %c0_1 = arith.constant 0 : index
    %3 = vector.load %arg11[%c0, %c0_1] : memref<16x128xf32, #tpu.memory_space<vmem>>, vector<16x128xf32>
    %c0_2 = arith.constant 0 : index
    %c0_3 = arith.constant 0 : index
    %4 = vector.load %arg1[%c0_2, %c0_3] : memref<16x128xbf16, #tpu.memory_space<vmem>>, vector<16x128xbf16>
    %c0_4 = arith.constant 0 : index
    %c0_5 = arith.constant 0 : index
    %5 = vector.load %arg2[%c0_4, %c0_5] : memref<128x128xbf16, #tpu.memory_space<vmem>>, vector<128x128xbf16>
    %cst = arith.constant dense<0.000000e+00> : vector<16x128xf32>
    %6 = tpu.matmul %4, %5, %cst {dimension_numbers = #tpu.dot_dimension_numbers<[1], [0], [0], [1], [0, 0, 1, 1], [], []>} : vector<16x128xbf16>, vector<128x128xbf16>, vector<16x128xf32> -> vector<16x128xf32>
    %7 = arith.addf %3, %6 : vector<16x128xf32>
    %c0_6 = arith.constant 0 : index
    %c0_7 = arith.constant 0 : index
    %8 = vector.load %arg11[%c0_6, %c0_7] : memref<16x128xf32, #tpu.memory_space<vmem>>, vector<16x128xf32>
    tpu.vector_store %arg11[%c0_6, %c0_7], %7 {strides = array<i32>} : memref<16x128xf32, #tpu.memory_space<vmem>>, vector<16x128xf32>,
    %c1_i32 = arith.constant 1 : i32
    %9 = arith.cmpi eq, %arg0, %c1_i32 : i32
    %10 = arith.extui %9 : i1 to i32
    %c0_i32_8 = arith.constant 0 : i32
    %11 = arith.cmpi ne, %10, %c0_i32_8 : i32
    scf.if %11 {
      %c0_9 = arith.constant 0 : index
      %c0_10 = arith.constant 0 : index
      %12 = vector.load %arg11[%c0_9, %c0_10] : memref<16x128xf32, #tpu.memory_space<vmem>>, vector<16x128xf32>
      %c0_11 = arith.constant 0 : index
      %c0_12 = arith.constant 0 : index
      %13 = vector.load %arg3[%c0_11, %c0_12] : memref<1x128xf32, #tpu.memory_space<vmem>>, vector<1x128xf32>
      %14 = vector.broadcast %13 : vector<1x128xf32> to vector<16x128xf32>
      %15 = arith.addf %12, %14 : vector<16x128xf32>
      %c0_13 = arith.constant 0 : index
      %c0_14 = arith.constant 0 : index
      %16 = vector.load %arg5[%c0_13, %c0_14] : memref<16x16xf32, #tpu.memory_space<vmem>>, vector<16x16xf32>
      %cst_15 = arith.constant dense<0.000000e+00> : vector<16xf32>
      %17 = vector.multi_reduction <add>, %16, %cst_15 [1] : vector<16x16xf32> to vector<16xf32>
      %18 = vector.shape_cast %17 : vector<16xf32> to vector<16x1xf32>
      %cst_16 = arith.constant 1.000000e+00 : f32
      %19 = vector.broadcast %cst_16 : f32 to vector<16x1xf32>
      %20 = arith.maximumf %18, %19 : vector<16x1xf32>
      %21 = tpu.reciprocal %20 {approx = true} : vector<16x1xf32> -> vector<16x1xf32>
      %22 = vector.broadcast %21 : vector<16x1xf32> to vector<16x16xf32>
      %23 = arith.mulf %16, %22 : vector<16x16xf32>
      %c0_17 = arith.constant 0 : index
      %c0_18 = arith.constant 0 : index
      %c0_19 = arith.constant 0 : index
      %24 = vector.load %arg4[%c0_17, %c0_18, %c0_19] : memref<16x16x128xbf16, #tpu.memory_space<vmem>>, vector<16x16x128xbf16>
      %25 = arith.extf %24 : vector<16x16x128xbf16> to vector<16x16x128xf32>
      %26 = vector.shape_cast %23 : vector<16x16xf32> to vector<16x16x1xf32>
      %27 = vector.broadcast %26 : vector<16x16x1xf32> to vector<16x16x128xf32>
      %28 = arith.mulf %25, %27 : vector<16x16x128xf32>
      %cst_20 = arith.constant dense<0.000000e+00> : vector<16x128xf32>
      %29 = vector.multi_reduction <add>, %28, %cst_20 [1] : vector<16x16x128xf32> to vector<16x128xf32>
      %30 = arith.truncf %29 : vector<16x128xf32> to vector<16x128xbf16>
      %c0_21 = arith.constant 0 : index
      %c0_22 = arith.constant 0 : index
      %31 = vector.load %arg6[%c0_21, %c0_22] : memref<128x128xbf16, #tpu.memory_space<vmem>>, vector<128x128xbf16>
      %cst_23 = arith.constant dense<0.000000e+00> : vector<16x128xf32>
      %32 = tpu.matmul %30, %31, %cst_23 {dimension_numbers = #tpu.dot_dimension_numbers<[1], [0], [0], [1], [0, 0, 1, 1], [], []>} : vector<16x128xbf16>, vector<128x128xbf16>, vector<16x128xf32> -> vector<16x128xf32>
      %c0_24 = arith.constant 0 : index
      %c0_25 = arith.constant 0 : index
      %33 = vector.load %arg7[%c0_24, %c0_25] : memref<1x128xf32, #tpu.memory_space<vmem>>, vector<1x128xf32>
      %34 = vector.broadcast %33 : vector<1x128xf32> to vector<16x128xf32>
      %35 = arith.addf %32, %34 : vector<16x128xf32>
      %36 = arith.mulf %35, %35 : vector<16x128xf32>
      %cst_26 = arith.constant dense<0.000000e+00> : vector<16xf32>
      %37 = vector.multi_reduction <add>, %36, %cst_26 [1] : vector<16x128xf32> to vector<16xf32>
      %38 = vector.shape_cast %37 : vector<16xf32> to vector<16x1xf32>
      %cst_27 = arith.constant 1.000000e-24 : f32
      %39 = vector.broadcast %cst_27 : f32 to vector<16x1xf32>
      %40 = arith.maximumf %38, %39 : vector<16x1xf32>
      %41 = math.rsqrt %40 : vector<16x1xf32>
      %42 = vector.broadcast %41 : vector<16x1xf32> to vector<16x128xf32>
      %43 = arith.mulf %35, %42 : vector<16x128xf32>
      %44 = arith.mulf %15, %15 : vector<16x128xf32>
      %cst_28 = arith.constant dense<0.000000e+00> : vector<16xf32>
      %45 = vector.multi_reduction <add>, %44, %cst_28 [1] : vector<16x128xf32> to vector<16xf32>
      %46 = vector.shape_cast %45 : vector<16xf32> to vector<16x1xf32>
      %cst_29 = arith.constant 1.000000e-24 : f32
      %47 = vector.broadcast %cst_29 : f32 to vector<16x1xf32>
      %48 = arith.maximumf %46, %47 : vector<16x1xf32>
      %49 = math.rsqrt %48 : vector<16x1xf32>
      %50 = vector.broadcast %49 : vector<16x1xf32> to vector<16x128xf32>
      %51 = arith.mulf %15, %50 : vector<16x128xf32>
      %52 = tpu.concatenate %43, %51 in 1 : vector<16x128xf32>, vector<16x128xf32> -> vector<16x256xf32>
      %53 = arith.truncf %52 : vector<16x256xf32> to vector<16x256xbf16>
      %c0_30 = arith.constant 0 : index
      %c0_31 = arith.constant 0 : index
      %54 = vector.load %arg8[%c0_30, %c0_31] : memref<256x128xbf16, #tpu.memory_space<vmem>>, vector<256x128xbf16>
      %cst_32 = arith.constant dense<0.000000e+00> : vector<16x128xf32>
      %55 = tpu.matmul %53, %54, %cst_32 {dimension_numbers = #tpu.dot_dimension_numbers<[1], [0], [0], [1], [0, 0, 1, 1], [], []>} : vector<16x256xbf16>, vector<256x128xbf16>, vector<16x128xf32> -> vector<16x128xf32>
      %c0_33 = arith.constant 0 : index
      %c0_34 = arith.constant 0 : index
      %56 = vector.load %arg9[%c0_33, %c0_34] : memref<1x128xf32, #tpu.memory_space<vmem>>, vector<1x128xf32>
      %57 = vector.broadcast %56 : vector<1x128xf32> to vector<16x128xf32>
      %58 = arith.addf %55, %57 : vector<16x128xf32>
      %c0_35 = arith.constant 0 : index
      %c0_36 = arith.constant 0 : index
      %59 = vector.load %arg10[%c0_35, %c0_36] : memref<16x128xf32, #tpu.memory_space<vmem>>, vector<16x128xf32>
      tpu.vector_store %arg10[%c0_35, %c0_36], %58 {strides = array<i32>} : memref<16x128xf32, #tpu.memory_space<vmem>>, vector<16x128xf32>,
    } else {
    }
    return
  }
  func.func @transform_0(%arg0: i32) -> (i32, i32) {
    %c0_i32 = arith.constant 0 : i32
    %c0_i32_0 = arith.constant 0 : i32
    return %c0_i32, %arg0 : i32, i32
  }
  func.func @transform_1(%arg0: i32) -> (i32, i32) {
    %c0_i32 = arith.constant 0 : i32
    %c0_i32_0 = arith.constant 0 : i32
    return %arg0, %c0_i32 : i32, i32
  }
  func.func @transform_2(%arg0: i32) -> (i32, i32) {
    %c0_i32 = arith.constant 0 : i32
    %c0_i32_0 = arith.constant 0 : i32
    %c0_i32_1 = arith.constant 0 : i32
    return %c0_i32, %c0_i32_0 : i32, i32
  }
  func.func @transform_3(%arg0: i32) -> (i32, i32, i32) {
    %c0_i32 = arith.constant 0 : i32
    %c0_i32_0 = arith.constant 0 : i32
    %c0_i32_1 = arith.constant 0 : i32
    %c0_i32_2 = arith.constant 0 : i32
    return %c0_i32, %c0_i32_0, %c0_i32_1 : i32, i32, i32
  }
  func.func @transform_4(%arg0: i32) -> (i32, i32) {
    %c0_i32 = arith.constant 0 : i32
    %c0_i32_0 = arith.constant 0 : i32
    %c0_i32_1 = arith.constant 0 : i32
    return %c0_i32, %c0_i32_0 : i32, i32
  }
  func.func @transform_5(%arg0: i32) -> (i32, i32) {
    %c0_i32 = arith.constant 0 : i32
    %c0_i32_0 = arith.constant 0 : i32
    %c0_i32_1 = arith.constant 0 : i32
    return %c0_i32, %c0_i32_0 : i32, i32
  }
  func.func @transform_6(%arg0: i32) -> (i32, i32) {
    %c0_i32 = arith.constant 0 : i32
    %c0_i32_0 = arith.constant 0 : i32
    %c0_i32_1 = arith.constant 0 : i32
    return %c0_i32, %c0_i32_0 : i32, i32
  }
  func.func @transform_7(%arg0: i32) -> (i32, i32) {
    %c0_i32 = arith.constant 0 : i32
    %c0_i32_0 = arith.constant 0 : i32
    %c0_i32_1 = arith.constant 0 : i32
    return %c0_i32, %c0_i32_0 : i32, i32
  }
  func.func @transform_8(%arg0: i32) -> (i32, i32) {
    %c0_i32 = arith.constant 0 : i32
    %c0_i32_0 = arith.constant 0 : i32
    %c0_i32_1 = arith.constant 0 : i32
    return %c0_i32, %c0_i32_0 : i32, i32
  }
  func.func @transform_9(%arg0: i32) -> (i32, i32) {
    %c0_i32 = arith.constant 0 : i32
    %c0_i32_0 = arith.constant 0 : i32
    %c0_i32_1 = arith.constant 0 : i32
    return %c0_i32, %c0_i32_0 : i32, i32
  }
}

</mosaic_0001>

<llo_original>
// kernel: combine_model_forward.2
$region0: #{combine_model_forward.2}
  #allocation0 [shape = 'u32[]', space=smem, size = 0x4, offset = 0x4, fixed_abs, tag = 'smem constant byte address 0x4 - core index']
  #allocation1 [shape = 'u32[144,128]{1,0:T(1,128)}', space=vmem, size = 0x12000, scoped, tag = 'internal scratch']
  #allocation2 [shape = 'f32[128,128]{1,0:T(8,128)}', space=vmem, size = 0x10000, scoped, tag = 'scratch operand']
  %s0 = inlined_call_operand.vmem [shape: bf16[256,256], index: 0, kind: input, shape index: {}]
  %s1 = inlined_call_operand.vmem [shape: bf16[256,128], index: 1, kind: input, shape index: {}]
  %s2 = inlined_call_operand.vmem [shape: bf16[128,128], index: 2, kind: input, shape index: {}]
  %s3 = inlined_call_operand.vmem [shape: f32[1,128], index: 3, kind: input, shape index: {}]
  %s4 = inlined_call_operand.vmem [shape: bf16[128,128], index: 4, kind: input, shape index: {}]
  %s5 = inlined_call_operand.vmem [shape: bf16[256,128], index: 5, kind: output, shape index: {}]
  %s6 = sld [smem:[#allocation0]]
  $region102: #{combine_model_forward.2} parent=0
    _
  %s8 = ssub.s32 1, %s6
  %s9 = scalar_select 0, %s8, %s6
  $region1: #{combine_model_forward.2} parent=0
    #allocation3 [shape = 'u8[65536]{0}', space=vmem, size = 0x10000, scoped, tag = 'input window, operand 0']
    loop: start=0, step=1, limit=6
    $region2: #{combine_model_forward.2} parent=1 // loop_pre_header
      _
    $region3: #{combine_model_forward.2} parent=1 // loop_header
      %s11 = sphi 0, %s15
      %p12 = scmp.ge.s32.totalorder %s11, 6
      %s18 = sphi 0, %s30
      %s19 = sphi 0, %s26
      %s20 = sphi 0, %s18
      %s21 = sphi 0, %s19
      %s22 = sphi 0, %s20
      %s23 = sphi 0, %s21
      %s35 = sphi 0, %s37
      %s38 = sphi 0, %s35
      %s39 = sphi 0, %s38
      %s55 = sphi 0, %s39
      %s61 = sphi 0, %s63
      %s64 = sphi 0, %s61
      %s65 = sphi 0, %s64
      %s81 = sphi 0, %s65
      %s85 = sphi 0, %s85
      %s87 = sphi 0, %s85
      %s88 = sphi 0, %s87
      %s102 = sphi 0, %s88
      %s106 = sphi 0, %s106
      %s108 = sphi 0, %s106
      %s109 = sphi 0, %s108
      %s123 = sphi 0, %s109
      %s127 = sphi 0, %s127
      %s129 = sphi 0, %s127
      %s130 = sphi 0, %s129
      %s144 = sphi 0, %s130
      %s150 = sphi 0, %s152
      %s153 = sphi 0, %s150
      %s154 = sphi 0, %s153
      %s170 = sphi 0, %s154
    $region4: #{combine_model_forward.2} parent=1 // loop_header_branch
      %14 = sbr.rel (%p12) target = $region8
    $region5: #{combine_model_forward.2} parent=1 // loop_body
      %s16 = ssub.s32 %s11, 1
      %s17 = ssub.s32 %s11, 2
      %s24 = sadd.s32 1, %s19
      %p25 = scmp.ge.s32.totalorder %s24, 2
      %s26 = scalar_select %p25, 0, %s24
      %s27 = sadd.s32 1, %s18
      %s28 = scalar_select %p25, %s27, %s18
      %p29 = scmp.ge.s32.totalorder %s28, 2
      %s30 = scalar_select %p29, 0, %s28
      %s31 = ssub.s32 %s18, %s30
      %s32 = ssub.s32 %s19, %s26
      %s33 = sor.u32 %s31, %s32
      %p34 = scmp.eq.s32.totalorder %s33, 0
      %s36 = sadd.s32 %s35, 1
      %s37 = scalar_select %p34, %s35, %s36
      %p40 = pneg %p34
      %p41 = scmp.eq.s32.totalorder %s11, 3
      %p42 = por %p40, %p41
      %p43 = scmp.ne.s32.totalorder %s35, %s38
      %p44 = scmp.eq.s32.totalorder %s11, 0
      %p45 = por %p43, %p44
      %p46 = scmp.ne.s32.totalorder %s35, %s38
      %p47 = scmp.eq.s32.totalorder %s16, 3
      %p48 = por %p46, %p47
      %p49 = scmp.ne.s32.totalorder %s38, %s39
      %p50 = scmp.eq.s32.totalorder %s16, 0
      %p51 = por %p49, %p50
      %p52 = scmp.ne.s32.totalorder %s38, %s39
      %p53 = scmp.eq.s32.totalorder %s17, 3
      %p54 = por %p52, %p53
      %p56 = scmp.ne.s32.totalorder %s39, %s55
      %p57 = scmp.eq.s32.totalorder %s17, 0
      %p58 = por %p56, %p57
      %s59 = ssub.s32 %s19, %s26
      %p60 = scmp.eq.s32.totalorder %s59, 0
      %s62 = sadd.s32 %s61, 1
      %s63 = scalar_select %p60, %s61, %s62
      %p66 = pneg %p60
      %p67 = scmp.eq.s32.totalorder %s11, 3
      %p68 = por %p66, %p67
      %p69 = scmp.ne.s32.totalorder %s61, %s64
      %p70 = scmp.eq.s32.totalorder %s11, 0
      %p71 = por %p69, %p70
      %p72 = scmp.ne.s32.totalorder %s61, %s64
      %p73 = scmp.eq.s32.totalorder %s16, 3
      %p74 = por %p72, %p73
      %p75 = scmp.ne.s32.totalorder %s64, %s65
      %p76 = scmp.eq.s32.totalorder %s16, 0
      %p77 = por %p75, %p76
      %p78 = scmp.ne.s32.totalorder %s64, %s65
      %p79 = scmp.eq.s32.totalorder %s17, 3
      %p80 = por %p78, %p79
      %p82 = scmp.ne.s32.totalorder %s65, %s81
      %p83 = scmp.eq.s32.totalorder %s17, 0
      %p84 = por %p82, %p83
      %s86 = sadd.s32 %s85, 1
      %p89 = scmp.eq.s32.totalorder %s11, 3
      %p90 = scmp.ne.s32.totalorder %s85, %s87
      %p91 = scmp.eq.s32.totalorder %s11, 0
      %p92 = por %p90, %p91
      %p93 = scmp.ne.s32.totalorder %s85, %s87
      %p94 = scmp.eq.s32.totalorder %s16, 3
      %p95 = por %p93, %p94
      %p96 = scmp.ne.s32.totalorder %s87, %s88
      %p97 = scmp.eq.s32.totalorder %s16, 0
      %p98 = por %p96, %p97
      %p99 = scmp.ne.s32.totalorder %s87, %s88
      %p100 = scmp.eq.s32.totalorder %s17, 3
      %p101 = por %p99, %p100
      %p103 = scmp.ne.s32.totalorder %s88, %s102
      %p104 = scmp.eq.s32.totalorder %s17, 0
      %p105 = por %p103, %p104
      %s107 = sadd.s32 %s106, 1
      %p110 = scmp.eq.s32.totalorder %s11, 3
      %p111 = scmp.ne.s32.totalorder %s106, %s108
      %p112 = scmp.eq.s32.totalorder %s11, 0
      %p113 = por %p111, %p112
      %p114 = scmp.ne.s32.totalorder %s106, %s108
      %p115 = scmp.eq.s32.totalorder %s16, 3
      %p116 = por %p114, %p115
      %p117 = scmp.ne.s32.totalorder %s108, %s109
      %p118 = scmp.eq.s32.totalorder %s16, 0
      %p119 = por %p117, %p118
      %p120 = scmp.ne.s32.totalorder %s108, %s109
      %p121 = scmp.eq.s32.totalorder %s17, 3
      %p122 = por %p120, %p121
      %p124 = scmp.ne.s32.totalorder %s109, %s123
      %p125 = scmp.eq.s32.totalorder %s17, 0
      %p126 = por %p124, %p125
      %s128 = sadd.s32 %s127, 1
      %p131 = scmp.eq.s32.totalorder %s11, 3
      %p132 = scmp.ne.s32.totalorder %s127, %s129
      %p133 = scmp.eq.s32.totalorder %s11, 0
      %p134 = por %p132, %p133
      %p135 = scmp.ne.s32.totalorder %s127, %s129
      %p136 = scmp.eq.s32.totalorder %s16, 3
      %p137 = por %p135, %p136
      %p138 = scmp.ne.s32.totalorder %s129, %s130
      %p139 = scmp.eq.s32.totalorder %s16, 0
      %p140 = por %p138, %p139
      %p141 = scmp.ne.s32.totalorder %s129, %s130
      %p142 = scmp.eq.s32.totalorder %s17, 3
      %p143 = por %p141, %p142
      %p145 = scmp.ne.s32.totalorder %s130, %s144
      %p146 = scmp.eq.s32.totalorder %s17, 0
      %p147 = por %p145, %p146
      %s148 = ssub.s32 %s18, %s30
      %p149 = scmp.eq.s32.totalorder %s148, 0
      %s151 = sadd.s32 %s150, 1
      %s152 = scalar_select %p149, %s150, %s151
      %p155 = pneg %p149
      %p156 = scmp.eq.s32.totalorder %s11, 3
      %p157 = por %p155, %p156
      %p158 = scmp.ne.s32.totalorder %s150, %s153
      %p159 = scmp.eq.s32.totalorder %s11, 0
      %p160 = por %p158, %p159
      %p161 = scmp.ne.s32.totalorder %s150, %s153
      %p162 = scmp.eq.s32.totalorder %s16, 3
      %p163 = por %p161, %p162
      %p164 = scmp.ne.s32.totalorder %s153, %s154
      %p165 = scmp.eq.s32.totalorder %s16, 0
      %p166 = por %p164, %p165
      %p167 = scmp.ne.s32.totalorder %s153, %s154
      %p168 = scmp.eq.s32.totalorder %s17, 3
      %p169 = por %p167, %p168
      %p171 = scmp.ne.s32.totalorder %s154, %s170
      %p172 = scmp.eq.s32.totalorder %s17, 0
      %p173 = por %p171, %p172
      %p174 = scmp.le.s32.totalorder 1, %s11
      %p175 = scmp.lt.s32.totalorder %s11, 5
      %p176 = pnand %p174, %p175
      %p177 = pneg %p176
      // Predicated region
      $region9: #{combine_model_forward.2} parent=5 // pred_check
        _
      $region10: #{combine_model_forward.2} parent=5 // pred_check_branch
        %179 = sbr.rel (%p176) target = $region12
      $region11: #{combine_model_forward.2} parent=5 // pred_region
        %s180 = ssub.s32 %s11, 1
        // Predicated region
        $region13: #{combine_model_forward.2} parent=11 // pred_check
          %p181 = pneg %p98
        $region14: #{combine_model_forward.2} parent=11 // pred_check_branch
          %183 = sbr.rel (%p181) target = $region16
        $region15: #{combine_model_forward.2} parent=11 // pred_region
          _
        $region16: #{combine_model_forward.2} parent=11 // pred_fallthru
          _
        // Predicated region
        $region17: #{combine_model_forward.2} parent=11 // pred_check
          %p184 = pneg %p119
        $region18: #{combine_model_forward.2} parent=11 // pred_check_branch
          %186 = sbr.rel (%p184) target = $region20
        $region19: #{combine_model_forward.2} parent=11 // pred_region
          _
        $region20: #{combine_model_forward.2} parent=11 // pred_fallthru
          _
        // Predicated region
        $region21: #{combine_model_forward.2} parent=11 // pred_check
          %p187 = pneg %p140
        $region22: #{combine_model_forward.2} parent=11 // pred_check_branch
          %189 = sbr.rel (%p187) target = $region24
        $region23: #{combine_model_forward.2} parent=11 // pred_region
          _
        $region24: #{combine_model_forward.2} parent=11 // pred_fallthru
          _
      $region12: #{combine_model_forward.2} parent=5 // pred_fallthru
        _
      %p190 = scmp.lt.s32.totalorder %s11, 4
      // Predicated region
      $region25: #{combine_model_forward.2} parent=5 // pred_check
        %p191 = pneg %p190
      $region26: #{combine_model_forward.2} parent=5 // pred_check_branch
        %193 = sbr.rel (%p191) target = $region28
      $region27: #{combine_model_forward.2} parent=5 // pred_region
        // Predicated region
        $region29: #{combine_model_forward.2} parent=27 // pred_check
          %p194 = pneg %p45
        $region30: #{combine_model_forward.2} parent=27 // pred_check_branch
          %196 = sbr.rel (%p194) target = $region32
        $region31: #{combine_model_forward.2} parent=27 // pred_region
          %s197 = sand.u32 %s35, 1
          %s198 = sand.u32 %s35, 1
          %s199 = smul.addr %s198, 64
          %s200 = scalar_lea.vmem [#allocation3], %s199
          %s201 = smul.u32 16, %s18
          %s202 = smul.addr %s201, 2
          %s203 = sadd.s32 %s19, %s202
          %s204 = smul.addr %s203, 4
          %s205 = scalar_lea.vmem %s0, %s204
          // Predicated region
          $region33: #{combine_model_forward.2} parent=31 // pred_check
            _
          $region34: #{combine_model_forward.2} parent=31 // pred_check_branch
            %207 = sbr.rel (0) target = $region36
          $region35: #{combine_model_forward.2} parent=31 // pred_region
            // Predicated region
            $region37: #{combine_model_forward.2} parent=35 // pred_check
              _
            $region38: #{combine_model_forward.2} parent=35 // pred_check_branch
              %209 = sbr.rel target = $region40
            $region39: #{combine_model_forward.2} parent=35 // pred_region
              // Predicated region
              $region52: #{combine_model_forward.2} parent=39 // pred_check
                _
              $region53: #{combine_model_forward.2} parent=39 // pred_check_branch
                %254 = sbr.rel (0) target = $region55
              $region54: #{combine_model_forward.2} parent=39 // pred_region
                loop: start=0, step=1, limit=1
                $region56: #{combine_model_forward.2} parent=54 // loop_pre_header
                  _
                $region57: #{combine_model_forward.2} parent=54 // loop_header
                  %s256 = sphi 0, %s260
                  %p257 = scmp.ge.s32.totalorder %s256, 1
                  %s261 = sphi %s205, %s205
                  %s262 = sphi %s200, %s200
                $region58: #{combine_model_forward.2} parent=54 // loop_header_branch
                  %259 = sbr.rel (%p257) target = $region62
                $region59: #{combine_model_forward.2} parent=54 // loop_body
                  _
                $region60: #{combine_model_forward.2} parent=54 // loop_footer
                  %s260 = sadd.s32 1, %s256
                $region61: #{combine_model_forward.2} parent=54 // loop_footer_branch
                  %255 = sbr.rel target = $region57
                $region62: #{combine_model_forward.2} parent=54 // loop_exit
                  _
                loop: start=0, step=1, limit=1
                $region63: #{combine_model_forward.2} parent=54 // loop_pre_header
                  _
                $region64: #{combine_model_forward.2} parent=54 // loop_header
                  %s265 = sphi 0, %s269
                  %p266 = scmp.ge.s32.totalorder %s265, 1
                  %s270 = sphi %s205, %s205
                  %s271 = sphi %s200, %s200
                $region65: #{combine_model_forward.2} parent=54 // loop_header_branch
                  %268 = sbr.rel (%p266) target = $region69
                $region66: #{combine_model_forward.2} parent=54 // loop_body
                  %v272 = vld [vmem:[%s270] sm:$0xf]
                  %273 = vst [vmem:[%s271] sm:$0xf] %v272
                  %v274 = vld [vmem:[%s270 + $0x8] sm:$0xf]
                  %275 = vst [vmem:[%s271 + $0x4] sm:$0xf] %v274
                  %v276 = vld [vmem:[%s270 + $0x10] sm:$0xf]
                  %277 = vst [vmem:[%s271 + $0x8] sm:$0xf] %v276
                  %v278 = vld [vmem:[%s270 + $0x18] sm:$0xf]
                  %279 = vst [vmem:[%s271 + $0xc] sm:$0xf] %v278
                  %v280 = vld [vmem:[%s270 + $0x20] sm:$0xf]
                  %281 = vst [vmem:[%s271 + $0x10] sm:$0xf] %v280
                  %v282 = vld [vmem:[%s270 + $0x28] sm:$0xf]
                  %283 = vst [vmem:[%s271 + $0x14] sm:$0xf] %v282
                  %v284 = vld [vmem:[%s270 + $0x30] sm:$0xf]
                  %285 = vst [vmem:[%s271 + $0x18] sm:$0xf] %v284
                  %v286 = vld [vmem:[%s270 + $0x38] sm:$0xf]
                  %287 = vst [vmem:[%s271 + $0x1c] sm:$0xf] %v286
                  %v288 = vld [vmem:[%s270 + $0x40] sm:$0xf]
                  %289 = vst [vmem:[%s271 + $0x20] sm:$0xf] %v288
                  %v290 = vld [vmem:[%s270 + $0x48] sm:$0xf]
                  %291 = vst [vmem:[%s271 + $0x24] sm:$0xf] %v290
                  %v292 = vld [vmem:[%s270 + $0x50] sm:$0xf]
                  %293 = vst [vmem:[%s271 + $0x28] sm:$0xf] %v292
                  %v294 = vld [vmem:[%s270 + $0x58] sm:$0xf]
                  %295 = vst [vmem:[%s271 + $0x2c] sm:$0xf] %v294
                  %v296 = vld [vmem:[%s270 + $0x60] sm:$0xf]
                  %297 = vst [vmem:[%s271 + $0x30] sm:$0xf] %v296
                  %v298 = vld [vmem:[%s270 + $0x68] sm:$0xf]
                  %299 = vst [vmem:[%s271 + $0x34] sm:$0xf] %v298
                  %v300 = vld [vmem:[%s270 + $0x70] sm:$0xf]
                  %301 = vst [vmem:[%s271 + $0x38] sm:$0xf] %v300
                  %v302 = vld [vmem:[%s270 + $0x78] sm:$0xf]
                  %303 = vst [vmem:[%s271 + $0x3c] sm:$0xf] %v302
                $region67: #{combine_model_forward.2} parent=54 // loop_footer
                  %s269 = sadd.s32 1, %s265
                $region68: #{combine_model_forward.2} parent=54 // loop_footer_branch
                  %264 = sbr.rel target = $region64
                $region69: #{combine_model_forward.2} parent=54 // loop_exit
                  _
              $region55: #{combine_model_forward.2} parent=39 // pred_fallthru
                _
            $region40: #{combine_model_forward.2} parent=35 // pred_fallthru
              _
            // Predicated region
            $region41: #{combine_model_forward.2} parent=35 // pred_check
              _
            $region42: #{combine_model_forward.2} parent=35 // pred_check_branch
              %211 = sbr.rel (0) target = $region44
            $region43: #{combine_model_forward.2} parent=35 // pred_region
              loop: start=0, step=1, limit=1
              $region45: #{combine_model_forward.2} parent=43 // loop_pre_header
                _
              $region46: #{combine_model_forward.2} parent=43 // loop_header
                %s214 = sphi 0, %s218
                %p215 = scmp.ge.s32.totalorder %s214, 1
                %s219 = sphi %s205, %s205
                %s220 = sphi %s200, %s200
              $region47: #{combine_model_forward.2} parent=43 // loop_header_branch
                %217 = sbr.rel (%p215) target = $region51
              $region48: #{combine_model_forward.2} parent=43 // loop_body
                %v221 = vld [vmem:[%s219] sm:$0xf]
                %222 = vst [vmem:[%s220] sm:$0xf] %v221
                %v223 = vld [vmem:[%s219 + $0x8] sm:$0xf]
                %224 = vst [vmem:[%s220 + $0x4] sm:$0xf] %v223
                %v225 = vld [vmem:[%s219 + $0x10] sm:$0xf]
                %226 = vst [vmem:[%s220 + $0x8] sm:$0xf] %v225
                %v227 = vld [vmem:[%s219 + $0x18] sm:$0xf]
                %228 = vst [vmem:[%s220 + $0xc] sm:$0xf] %v227
                %v229 = vld [vmem:[%s219 + $0x20] sm:$0xf]
                %230 = vst [vmem:[%s220 + $0x10] sm:$0xf] %v229
                %v231 = vld [vmem:[%s219 + $0x28] sm:$0xf]
                %232 = vst [vmem:[%s220 + $0x14] sm:$0xf] %v231
                %v233 = vld [vmem:[%s219 + $0x30] sm:$0xf]
                %234 = vst [vmem:[%s220 + $0x18] sm:$0xf] %v233
                %v235 = vld [vmem:[%s219 + $0x38] sm:$0xf]
                %236 = vst [vmem:[%s220 + $0x1c] sm:$0xf] %v235
                %v237 = vld [vmem:[%s219 + $0x40] sm:$0xf]
                %238 = vst [vmem:[%s220 + $0x20] sm:$0xf] %v237
                %v239 = vld [vmem:[%s219 + $0x48] sm:$0xf]
                %240 = vst [vmem:[%s220 + $0x24] sm:$0xf] %v239
                %v241 = vld [vmem:[%s219 + $0x50] sm:$0xf]
                %242 = vst [vmem:[%s220 + $0x28] sm:$0xf] %v241
                %v243 = vld [vmem:[%s219 + $0x58] sm:$0xf]
                %244 = vst [vmem:[%s220 + $0x2c] sm:$0xf] %v243
                %v245 = vld [vmem:[%s219 + $0x60] sm:$0xf]
                %246 = vst [vmem:[%s220 + $0x30] sm:$0xf] %v245
                %v247 = vld [vmem:[%s219 + $0x68] sm:$0xf]
                %248 = vst [vmem:[%s220 + $0x34] sm:$0xf] %v247
                %v249 = vld [vmem:[%s219 + $0x70] sm:$0xf]
                %250 = vst [vmem:[%s220 + $0x38] sm:$0xf] %v249
                %v251 = vld [vmem:[%s219 + $0x78] sm:$0xf]
                %252 = vst [vmem:[%s220 + $0x3c] sm:$0xf] %v251
              $region49: #{combine_model_forward.2} parent=43 // loop_footer
                %s218 = sadd.s32 1, %s214
              $region50: #{combine_model_forward.2} parent=43 // loop_footer_branch
                %213 = sbr.rel target = $region46
              $region51: #{combine_model_forward.2} parent=43 // loop_exit
                _
            $region44: #{combine_model_forward.2} parent=35 // pred_fallthru
              _
          $region36: #{combine_model_forward.2} parent=31 // pred_fallthru
            _
          %304 = vnop
        $region32: #{combine_model_forward.2} parent=27 // pred_fallthru
          _
        // Predicated region
        $region70: #{combine_model_forward.2} parent=27 // pred_check
          %p305 = pneg %p71
        $region71: #{combine_model_forward.2} parent=27 // pred_check_branch
          %307 = sbr.rel (%p305) target = $region73
        $region72: #{combine_model_forward.2} parent=27 // pred_region
          %s308 = smul.u32 16, %s19
          %p309 = scmp.lt.s32.totalorder %s308, 31
          %s310 = scalar_select %p309, %s308, 31
          %s311 = smul.addr %s310, 4
          %s312 = scalar_lea.vmem %s1, %s311
          %s313 = smul.u32 16, %s19
        $region73: #{combine_model_forward.2} parent=27 // pred_fallthru
          _
      $region28: #{combine_model_forward.2} parent=5 // pred_fallthru
        _
      %p314 = scmp.le.s32.totalorder 1, %s11
      %p315 = scmp.lt.s32.totalorder %s11, 5
      %p316 = pnand %p314, %p315
      %p317 = pneg %p316
      // Predicated region
      $region74: #{combine_model_forward.2} parent=5 // pred_check
        _
      $region75: #{combine_model_forward.2} parent=5 // pred_check_branch
        %319 = sbr.rel (%p316) target = $region77
      $region76: #{combine_model_forward.2} parent=5 // pred_region
        %s320 = ssub.s32 %s11, 1
        %s321 = sand.u32 %s38, 1
        %s322 = sand.u32 %s38, 1
        %s323 = smul.addr %s322, 64
        %s324 = scalar_lea.vmem [#allocation3], %s323
        // Predicated region
        $region78: #{combine_model_forward.2} parent=76 // pred_check
          %p325 = pneg %p51
        $region79: #{combine_model_forward.2} parent=76 // pred_check_branch
          %327 = sbr.rel (%p325) target = $region81
        $region80: #{combine_model_forward.2} parent=76 // pred_region
          _
        $region81: #{combine_model_forward.2} parent=76 // pred_fallthru
          _
        %s328 = sand.u32 %s38, 1
        %s329 = sand.u32 %s38, 1
        %s330 = smul.addr %s329, 64
        %s331 = scalar_lea.vmem [#allocation3], %s330
        %p332 = pneg %p51
        %p333 = pneg %p48
        %s334 = smul.u32 16, %s21
        %p335 = scmp.lt.s32.totalorder %s334, 31
        %s336 = scalar_select %p335, %s334, 31
        %s337 = smul.addr %s336, 4
        %s338 = scalar_lea.vmem %s1, %s337
        %p339 = pneg %p77
        %p340 = pneg %p74
        %p341 = pneg %p98
        %p342 = pneg %p95
        %p343 = pneg %p119
        %p344 = pneg %p116
        %p345 = pneg %p140
        %p346 = pneg %p137
        %p347 = pneg %p166
        %p348 = pneg %p163
        %s349 = smul.u32 16, %s20
        %p350 = scmp.lt.s32.totalorder %s349, 31
        %s351 = scalar_select %p350, %s349, 31
        %s352 = smul.addr %s351, 4
        %s353 = scalar_lea.vmem %s5, %s352
        %s354 = smul.u32 16, %s20
        %s355 = smul.u32 16, %s21
        %p356 = scmp.lt.s32.totalorder %s355, 31
        %s357 = scalar_select %p356, %s355, 31
        %s358 = smul.addr %s357, 4
        %s359 = scalar_lea.vmem %s1, %s358
        %s360 = smul.u32 16, %s21
        %s361 = smul.u32 16, %s20
        %p362 = scmp.lt.s32.totalorder %s361, 31
        %s363 = scalar_select %p362, %s361, 31
        %s364 = smul.addr %s363, 4
        %s365 = scalar_lea.vmem %s5, %s364
        %s366 = smul.u32 16, %s20
        %p368 = scmp.eq.s32.totalorder %s21, 0
        // Predicated region
        $region82: #{combine_model_forward.2} parent=76 // pred_check
          %p369 = pneg %p368
        $region83: #{combine_model_forward.2} parent=76 // pred_check_branch
          %371 = sbr.rel (%p369) target = $region85
        $region84: #{combine_model_forward.2} parent=76 // pred_region
          %372 = vst [vmem:[#allocation2] sm:$0xff] 0.0
          %373 = vst [vmem:[#allocation2 + $0x8] sm:$0xff] 0.0
          %374 = vst [vmem:[#allocation2 + $0x10] sm:$0xff] 0.0
          %375 = vst [vmem:[#allocation2 + $0x18] sm:$0xff] 0.0
          %376 = vst [vmem:[#allocation2 + $0x20] sm:$0xff] 0.0
          %377 = vst [vmem:[#allocation2 + $0x28] sm:$0xff] 0.0
          %378 = vst [vmem:[#allocation2 + $0x30] sm:$0xff] 0.0
          %379 = vst [vmem:[#allocation2 + $0x38] sm:$0xff] 0.0
          %380 = vst [vmem:[#allocation2 + $0x40] sm:$0xff] 0.0
          %381 = vst [vmem:[#allocation2 + $0x48] sm:$0xff] 0.0
          %382 = vst [vmem:[#allocation2 + $0x50] sm:$0xff] 0.0
          %383 = vst [vmem:[#allocation2 + $0x58] sm:$0xff] 0.0
          %384 = vst [vmem:[#allocation2 + $0x60] sm:$0xff] 0.0
          %385 = vst [vmem:[#allocation2 + $0x68] sm:$0xff] 0.0
          %386 = vst [vmem:[#allocation2 + $0x70] sm:$0xff] 0.0
          %387 = vst [vmem:[#allocation2 + $0x78] sm:$0xff] 0.0
        $region85: #{combine_model_forward.2} parent=76 // pred_fallthru
          _
        %v388 = vld [vmem:[#allocation2] sm:$0xff]
        %v389 = vld [vmem:[#allocation2 + $0x8] sm:$0xff]
        %v390 = vld [vmem:[#allocation2 + $0x10] sm:$0xff]
        %v391 = vld [vmem:[#allocation2 + $0x18] sm:$0xff]
        %v392 = vld [vmem:[#allocation2 + $0x20] sm:$0xff]
        %v393 = vld [vmem:[#allocation2 + $0x28] sm:$0xff]
        %v394 = vld [vmem:[#allocation2 + $0x30] sm:$0xff]
        %v395 = vld [vmem:[#allocation2 + $0x38] sm:$0xff]
        %v396 = vld [vmem:[#allocation2 + $0x40] sm:$0xff]
        %v397 = vld [vmem:[#allocation2 + $0x48] sm:$0xff]
        %v398 = vld [vmem:[#allocation2 + $0x50] sm:$0xff]
        %v399 = vld [vmem:[#allocation2 + $0x58] sm:$0xff]
        %v400 = vld [vmem:[#allocation2 + $0x60] sm:$0xff]
        %v401 = vld [vmem:[#allocation2 + $0x68] sm:$0xff]
        %v402 = vld [vmem:[#allocation2 + $0x70] sm:$0xff]
        %v403 = vld [vmem:[#allocation2 + $0x78] sm:$0xff]
        %v404 = vld [vmem:[%s324] sm:$0xf]
        %v405 = vld [vmem:[%s324 + $0x4] sm:$0xf]
        %v406 = vld [vmem:[%s324 + $0x8] sm:$0xf]
        %v407 = vld [vmem:[%s324 + $0xc] sm:$0xf]
        %v408 = vld [vmem:[%s324 + $0x10] sm:$0xf]
        %v409 = vld [vmem:[%s324 + $0x14] sm:$0xf]
        %v410 = vld [vmem:[%s324 + $0x18] sm:$0xf]
        %v411 = vld [vmem:[%s324 + $0x1c] sm:$0xf]
        %v412 = vld [vmem:[%s324 + $0x20] sm:$0xf]
        %v413 = vld [vmem:[%s324 + $0x24] sm:$0xf]
        %v414 = vld [vmem:[%s324 + $0x28] sm:$0xf]
        %v415 = vld [vmem:[%s324 + $0x2c] sm:$0xf]
        %v416 = vld [vmem:[%s324 + $0x30] sm:$0xf]
        %v417 = vld [vmem:[%s324 + $0x34] sm:$0xf]
        %v418 = vld [vmem:[%s324 + $0x38] sm:$0xf]
        %v419 = vld [vmem:[%s324 + $0x3c] sm:$0xf]
        %v420 = vld [vmem:[%s359] sm:$0xf]
        %v421 = vld [vmem:[%s359 + $0x4] sm:$0xf]
        %v422 = vld [vmem:[%s359 + $0x8] sm:$0xf]
        %v423 = vld [vmem:[%s359 + $0xc] sm:$0xf]
        %v424 = vld [vmem:[%s359 + $0x10] sm:$0xf]
        %v425 = vld [vmem:[%s359 + $0x14] sm:$0xf]
        %v426 = vld [vmem:[%s359 + $0x18] sm:$0xf]
        %v427 = vld [vmem:[%s359 + $0x1c] sm:$0xf]
        %v428 = vld [vmem:[%s359 + $0x20] sm:$0xf]
        %v429 = vld [vmem:[%s359 + $0x24] sm:$0xf]
        %v430 = vld [vmem:[%s359 + $0x28] sm:$0xf]
        %v431 = vld [vmem:[%s359 + $0x2c] sm:$0xf]
        %v432 = vld [vmem:[%s359 + $0x30] sm:$0xf]
        %v433 = vld [vmem:[%s359 + $0x34] sm:$0xf]
        %v434 = vld [vmem:[%s359 + $0x38] sm:$0xf]
        %v435 = vld [vmem:[%s359 + $0x3c] sm:$0xf]
        %v452 = vunpack.c.l.b16 %v404
        %v453 = vunpack.c.l.b16 %v405
        %v454 = vunpack.c.l.b16 %v406
        %v455 = vunpack.c.l.b16 %v407
        %v456 = vunpack.c.l.b16 %v408
        %v457 = vunpack.c.l.b16 %v409
        %v458 = vunpack.c.l.b16 %v410
        %v459 = vunpack.c.l.b16 %v411
        %v460 = vunpack.c.l.b16 %v412
        %v461 = vunpack.c.l.b16 %v413
        %v462 = vunpack.c.l.b16 %v414
        %v463 = vunpack.c.l.b16 %v415
        %v464 = vunpack.c.l.b16 %v416
        %v465 = vunpack.c.l.b16 %v417
        %v466 = vunpack.c.l.b16 %v418
        %v467 = vunpack.c.l.b16 %v419
        %v468 = vpack.c.b16 %v453, %v452
        %v469 = vpack.c.b16 %v455, %v454
        %v470 = vpack.c.b16 %v457, %v456
        %v471 = vpack.c.b16 %v459, %v458
        %v472 = vpack.c.b16 %v461, %v460
        %v473 = vpack.c.b16 %v463, %v462
        %v474 = vpack.c.b16 %v465, %v464
        %v475 = vpack.c.b16 %v467, %v466
        %v500 = vunpack.c.l.b16 %v420
        %v501 = vunpack.c.l.b16 %v421
        %v502 = vunpack.c.l.b16 %v422
        %v503 = vunpack.c.l.b16 %v423
        %v504 = vunpack.c.l.b16 %v424
        %v505 = vunpack.c.l.b16 %v425
        %v506 = vunpack.c.l.b16 %v426
        %v507 = vunpack.c.l.b16 %v427
        %v508 = vunpack.c.l.b16 %v428
        %v509 = vunpack.c.l.b16 %v429
        %v510 = vunpack.c.l.b16 %v430
        %v511 = vunpack.c.l.b16 %v431
        %v512 = vunpack.c.l.b16 %v432
        %v513 = vunpack.c.l.b16 %v433
        %v514 = vunpack.c.l.b16 %v434
        %v515 = vunpack.c.l.b16 %v435
        %v516 = vpack.c.b16 %v501, %v500
        %v517 = vpack.c.b16 %v503, %v502
        %v518 = vpack.c.b16 %v505, %v504
        %v519 = vpack.c.b16 %v507, %v506
        %v520 = vpack.c.b16 %v509, %v508
        %v521 = vpack.c.b16 %v511, %v510
        %v522 = vpack.c.b16 %v513, %v512
        %v523 = vpack.c.b16 %v515, %v514
        %532 = vmatprep.subr.bf16.mxu0 0
        %533 = vmatpush1.bf16.msra.mxu0 %v516
        %534 = vmatprep.subr.bf16.mxu0 0
        %535 = vmatpush1.bf16.msra.mxu0 %v517
        %536 = vmatprep.subr.bf16.mxu0 0
        %537 = vmatpush1.bf16.msra.mxu0 %v518
        %538 = vmatprep.subr.bf16.mxu0 0
        %539 = vmatpush1.bf16.msra.mxu0 %v519
        %540 = vmatprep.subr.bf16.mxu0 0
        %541 = vmatpush1.bf16.msra.mxu0 %v520
        %542 = vmatprep.subr.bf16.mxu0 0
        %543 = vmatpush1.bf16.msra.mxu0 %v521
        %544 = vmatprep.subr.bf16.mxu0 0
        %545 = vmatpush1.bf16.msra.mxu0 %v522
        %546 = vmatprep.subr.bf16.mxu0 0
        %547 = vmatpush1.bf16.msra.mxu0 %v523
        %548 = vmatprep.subr.bf16.mxu0 0
        %549 = vmatpush1.bf16.msra.mxu0 0
        %550 = vmatprep.subr.bf16.mxu0 0
        %551 = vmatpush1.bf16.msra.mxu0 0
        %552 = vmatprep.subr.bf16.mxu0 0
        %553 = vmatpush1.bf16.msra.mxu0 0
        %554 = vmatprep.subr.bf16.mxu0 0
        %555 = vmatpush1.bf16.msra.mxu0 0
        %556 = vmatprep.subr.bf16.mxu0 0
        %557 = vmatpush1.bf16.msra.mxu0 0
        %558 = vmatprep.subr.bf16.mxu0 0
        %559 = vmatpush1.bf16.msra.mxu0 0
        %560 = vmatprep.subr.bf16.mxu0 0
        %561 = vmatpush1.bf16.msra.mxu0 0
        %562 = vmatprep.subr.bf16.mxu0 0
        %563 = vmatpush1.bf16.msra.mxu0 0
        %564 = vmatprep.mubr.bf16.mxu0 0
        %565 = vmatmul.mubr.bf16.gmra.mrb[0].mxu0 %v468
        %v566 = vpop.f32.mrb[0].mxu0
        %v567 = vadd.f32 0.0, %v566
        %v568 = vpop.f32.mrb[0].mxu0
        %v569 = vpop.f32.mrb[0].mxu0
        %v570 = vadd.f32 0.0, %v569
        %v571 = vpop.f32.mrb[0].mxu0
        %572 = vmatprep.mubr.bf16.mxu0 0
        %573 = vmatmul.mubr.bf16.gmra.mrb[0].mxu0 %v469
        %v574 = vpop.f32.mrb[0].mxu0
        %v575 = vadd.f32 0.0, %v574
        %v576 = vpop.f32.mrb[0].mxu0
        %v577 = vpop.f32.mrb[0].mxu0
        %v578 = vadd.f32 0.0, %v577
        %v579 = vpop.f32.mrb[0].mxu0
        %580 = vmatprep.mubr.bf16.mxu0 0
        %581 = vmatmul.mubr.bf16.gmra.mrb[0].mxu0 %v470
        %v582 = vpop.f32.mrb[0].mxu0
        %v583 = vadd.f32 0.0, %v582
        %v584 = vpop.f32.mrb[0].mxu0
        %v585 = vpop.f32.mrb[0].mxu0
        %v586 = vadd.f32 0.0, %v585
        %v587 = vpop.f32.mrb[0].mxu0
        %588 = vmatprep.mubr.bf16.mxu0 0
        %589 = vmatmul.mubr.bf16.gmra.mrb[0].mxu0 %v471
        %v590 = vpop.f32.mrb[0].mxu0
        %v591 = vadd.f32 0.0, %v590
        %v592 = vpop.f32.mrb[0].mxu0
        %v593 = vpop.f32.mrb[0].mxu0
        %v594 = vadd.f32 0.0, %v593
        %v595 = vpop.f32.mrb[0].mxu0
        %596 = vmatprep.mubr.bf16.mxu0 0
        %597 = vmatmul.mubr.bf16.gmra.mrb[0].mxu0 %v472
        %v598 = vpop.f32.mrb[0].mxu0
        %v599 = vadd.f32 0.0, %v598
        %v600 = vpop.f32.mrb[0].mxu0
        %v601 = vpop.f32.mrb[0].mxu0
        %v602 = vadd.f32 0.0, %v601
        %v603 = vpop.f32.mrb[0].mxu0
        %604 = vmatprep.mubr.bf16.mxu0 0
        %605 = vmatmul.mubr.bf16.gmra.mrb[0].mxu0 %v473
        %v606 = vpop.f32.mrb[0].mxu0
        %v607 = vadd.f32 0.0, %v606
        %v608 = vpop.f32.mrb[0].mxu0
        %v609 = vpop.f32.mrb[0].mxu0
        %v610 = vadd.f32 0.0, %v609
        %v611 = vpop.f32.mrb[0].mxu0
        %612 = vmatprep.mubr.bf16.mxu0 0
        %613 = vmatmul.mubr.bf16.gmra.mrb[0].mxu0 %v474
        %v614 = vpop.f32.mrb[0].mxu0
        %v615 = vadd.f32 0.0, %v614
        %v616 = vpop.f32.mrb[0].mxu0
        %v617 = vpop.f32.mrb[0].mxu0
        %v618 = vadd.f32 0.0, %v617
        %v619 = vpop.f32.mrb[0].mxu0
        %620 = vmatprep.mubr.bf16.mxu0 0
        %621 = vmatmul.mubr.bf16.gmra.mrb[0].mxu0 %v475
        %v622 = vpop.f32.mrb[0].mxu0
        %v623 = vadd.f32 0.0, %v622
        %v624 = vpop.f32.mrb[0].mxu0
        %v625 = vpop.f32.mrb[0].mxu0
        %v626 = vadd.f32 0.0, %v625
        %v627 = vpop.f32.mrb[0].mxu0
        %628 = vdwg.mxu0
        %v629 = vadd.f32 %v388, %v567
        %v630 = vadd.f32 %v389, %v570
        %v631 = vadd.f32 %v390, %v575
        %v632 = vadd.f32 %v391, %v578
        %v633 = vadd.f32 %v392, %v583
        %v634 = vadd.f32 %v393, %v586
        %v635 = vadd.f32 %v394, %v591
        %v636 = vadd.f32 %v395, %v594
        %v637 = vadd.f32 %v396, %v599
        %v638 = vadd.f32 %v397, %v602
        %v639 = vadd.f32 %v398, %v607
        %v640 = vadd.f32 %v399, %v610
        %v641 = vadd.f32 %v400, %v615
        %v642 = vadd.f32 %v401, %v618
        %v643 = vadd.f32 %v402, %v623
        %v644 = vadd.f32 %v403, %v626
        %645 = vst [vmem:[#allocation2] sm:$0xff] %v629
        %646 = vst [vmem:[#allocation2 + $0x8] sm:$0xff] %v630
        %647 = vst [vmem:[#allocation2 + $0x10] sm:$0xff] %v631
        %648 = vst [vmem:[#allocation2 + $0x18] sm:$0xff] %v632
        %649 = vst [vmem:[#allocation2 + $0x20] sm:$0xff] %v633
        %650 = vst [vmem:[#allocation2 + $0x28] sm:$0xff] %v634
        %651 = vst [vmem:[#allocation2 + $0x30] sm:$0xff] %v635
        %652 = vst [vmem:[#allocation2 + $0x38] sm:$0xff] %v636
        %653 = vst [vmem:[#allocation2 + $0x40] sm:$0xff] %v637
        %654 = vst [vmem:[#allocation2 + $0x48] sm:$0xff] %v638
        %655 = vst [vmem:[#allocation2 + $0x50] sm:$0xff] %v639
        %656 = vst [vmem:[#allocation2 + $0x58] sm:$0xff] %v640
        %657 = vst [vmem:[#allocation2 + $0x60] sm:$0xff] %v641
        %658 = vst [vmem:[#allocation2 + $0x68] sm:$0xff] %v642
        %659 = vst [vmem:[#allocation2 + $0x70] sm:$0xff] %v643
        %660 = vst [vmem:[#allocation2 + $0x78] sm:$0xff] %v644
        %p661 = scmp.eq.s32.totalorder %s21, 1
        // Predicated region
        $region86: #{combine_model_forward.2} parent=76 // pred_check
          %p662 = pneg %p661
        $region87: #{combine_model_forward.2} parent=76 // pred_check_branch
          %664 = sbr.rel (%p662) target = $region89
        $region88: #{combine_model_forward.2} parent=76 // pred_region
          %v665 = vld [vmem:[#allocation2] sm:$0xff]
          %v666 = vld [vmem:[#allocation2 + $0x8] sm:$0xff]
          %v667 = vld [vmem:[#allocation2 + $0x10] sm:$0xff]
          %v668 = vld [vmem:[#allocation2 + $0x18] sm:$0xff]
          %v669 = vld [vmem:[#allocation2 + $0x20] sm:$0xff]
          %v670 = vld [vmem:[#allocation2 + $0x28] sm:$0xff]
          %v671 = vld [vmem:[#allocation2 + $0x30] sm:$0xff]
          %v672 = vld [vmem:[#allocation2 + $0x38] sm:$0xff]
          %v673 = vld [vmem:[#allocation2 + $0x40] sm:$0xff]
          %v674 = vld [vmem:[#allocation2 + $0x48] sm:$0xff]
          %v675 = vld [vmem:[#allocation2 + $0x50] sm:$0xff]
          %v676 = vld [vmem:[#allocation2 + $0x58] sm:$0xff]
          %v677 = vld [vmem:[#allocation2 + $0x60] sm:$0xff]
          %v678 = vld [vmem:[#allocation2 + $0x68] sm:$0xff]
          %v679 = vld [vmem:[#allocation2 + $0x70] sm:$0xff]
          %v680 = vld [vmem:[#allocation2 + $0x78] sm:$0xff]
          %v681 = vpack.c.bf16 %v666, %v665
          %v682 = vpack.c.bf16 %v668, %v667
          %v683 = vpack.c.bf16 %v670, %v669
          %v684 = vpack.c.bf16 %v672, %v671
          %v685 = vpack.c.bf16 %v674, %v673
          %v686 = vpack.c.bf16 %v676, %v675
          %v687 = vpack.c.bf16 %v678, %v677
          %v688 = vpack.c.bf16 %v680, %v679
          %v689 = vld [vmem:[%s2] sm:$0xf]
          %v690 = vld [vmem:[%s2 + $0x4] sm:$0xf]
          %v691 = vld [vmem:[%s2 + $0x8] sm:$0xf]
          %v692 = vld [vmem:[%s2 + $0xc] sm:$0xf]
          %v693 = vld [vmem:[%s2 + $0x10] sm:$0xf]
          %v694 = vld [vmem:[%s2 + $0x14] sm:$0xf]
          %v695 = vld [vmem:[%s2 + $0x18] sm:$0xf]
          %v696 = vld [vmem:[%s2 + $0x1c] sm:$0xf]
          %v697 = vld [vmem:[%s2 + $0x20] sm:$0xf]
          %v698 = vld [vmem:[%s2 + $0x24] sm:$0xf]
          %v699 = vld [vmem:[%s2 + $0x28] sm:$0xf]
          %v700 = vld [vmem:[%s2 + $0x2c] sm:$0xf]
          %v701 = vld [vmem:[%s2 + $0x30] sm:$0xf]
          %v702 = vld [vmem:[%s2 + $0x34] sm:$0xf]
          %v703 = vld [vmem:[%s2 + $0x38] sm:$0xf]
          %v704 = vld [vmem:[%s2 + $0x3c] sm:$0xf]
          %v705 = vld [vmem:[%s3] sm:$0x1]
          %v707 = vlaneseq
          %v708 = vshrl.u32 %v707, 7
          %v709 = vsub.s32 0, %v708
          %v710 = vrot.slane %v705, %v709
          %v728 = vunpack.c.l.b16 %v689
          %v729 = vunpack.c.l.b16 %v690
          %v730 = vunpack.c.l.b16 %v691
          %v731 = vunpack.c.l.b16 %v692
          %v732 = vunpack.c.l.b16 %v693
          %v733 = vunpack.c.l.b16 %v694
          %v734 = vunpack.c.l.b16 %v695
          %v735 = vunpack.c.l.b16 %v696
          %v736 = vunpack.c.l.b16 %v697
          %v737 = vunpack.c.l.b16 %v698
          %v738 = vunpack.c.l.b16 %v699
          %v739 = vunpack.c.l.b16 %v700
          %v740 = vunpack.c.l.b16 %v701
          %v741 = vunpack.c.l.b16 %v702
          %v742 = vunpack.c.l.b16 %v703
          %v743 = vunpack.c.l.b16 %v704
          %v744 = vpack.c.b16 %v729, %v728
          %v745 = vpack.c.b16 %v731, %v730
          %v746 = vpack.c.b16 %v733, %v732
          %v747 = vpack.c.b16 %v735, %v734
          %v748 = vpack.c.b16 %v737, %v736
          %v749 = vpack.c.b16 %v739, %v738
          %v750 = vpack.c.b16 %v741, %v740
          %v751 = vpack.c.b16 %v743, %v742
          %760 = vmatprep.subr.bf16.mxu0 0
          %761 = vmatpush1.bf16.msra.mxu0 %v744
          %762 = vmatprep.subr.bf16.mxu0 0
          %763 = vmatpush1.bf16.msra.mxu0 %v745
          %764 = vmatprep.subr.bf16.mxu0 0
          %765 = vmatpush1.bf16.msra.mxu0 %v746
          %766 = vmatprep.subr.bf16.mxu0 0
          %767 = vmatpush1.bf16.msra.mxu0 %v747
          %768 = vmatprep.subr.bf16.mxu0 0
          %769 = vmatpush1.bf16.msra.mxu0 %v748
          %770 = vmatprep.subr.bf16.mxu0 0
          %771 = vmatpush1.bf16.msra.mxu0 %v749
          %772 = vmatprep.subr.bf16.mxu0 0
          %773 = vmatpush1.bf16.msra.mxu0 %v750
          %774 = vmatprep.subr.bf16.mxu0 0
          %775 = vmatpush1.bf16.msra.mxu0 %v751
          %776 = vmatprep.subr.bf16.mxu0 0
          %777 = vmatpush1.bf16.msra.mxu0 0
          %778 = vmatprep.subr.bf16.mxu0 0
          %779 = vmatpush1.bf16.msra.mxu0 0
          %780 = vmatprep.subr.bf16.mxu0 0
          %781 = vmatpush1.bf16.msra.mxu0 0
          %782 = vmatprep.subr.bf16.mxu0 0
          %783 = vmatpush1.bf16.msra.mxu0 0
          %784 = vmatprep.subr.bf16.mxu0 0
          %785 = vmatpush1.bf16.msra.mxu0 0
          %786 = vmatprep.subr.bf16.mxu0 0
          %787 = vmatpush1.bf16.msra.mxu0 0
          %788 = vmatprep.subr.bf16.mxu0 0
          %789 = vmatpush1.bf16.msra.mxu0 0
          %790 = vmatprep.subr.bf16.mxu0 0
          %791 = vmatpush1.bf16.msra.mxu0 0
          %792 = vmatprep.mubr.bf16.mxu0 0
          %793 = vmatmul.mubr.bf16.gmra.mrb[0].mxu0 %v681
          %v794 = vpop.f32.mrb[0].mxu0
          %v795 = vadd.f32 %v710, %v794
          %v796 = vpop.f32.mrb[0].mxu0
          %v797 = vpop.f32.mrb[0].mxu0
          %v798 = vadd.f32 %v710, %v797
          %v799 = vpop.f32.mrb[0].mxu0
          %800 = vmatprep.mubr.bf16.mxu0 0
          %801 = vmatmul.mubr.bf16.gmra.mrb[0].mxu0 %v682
          %v802 = vpop.f32.mrb[0].mxu0
          %v803 = vadd.f32 %v710, %v802
          %v804 = vpop.f32.mrb[0].mxu0
          %v805 = vpop.f32.mrb[0].mxu0
          %v806 = vadd.f32 %v710, %v805
          %v807 = vpop.f32.mrb[0].mxu0
          %808 = vmatprep.mubr.bf16.mxu0 0
          %809 = vmatmul.mubr.bf16.gmra.mrb[0].mxu0 %v683
          %v810 = vpop.f32.mrb[0].mxu0
          %v811 = vadd.f32 %v710, %v810
          %v812 = vpop.f32.mrb[0].mxu0
          %v813 = vpop.f32.mrb[0].mxu0
          %v814 = vadd.f32 %v710, %v813
          %v815 = vpop.f32.mrb[0].mxu0
          %816 = vmatprep.mubr.bf16.mxu0 0
          %817 = vmatmul.mubr.bf16.gmra.mrb[0].mxu0 %v684
          %v818 = vpop.f32.mrb[0].mxu0
          %v819 = vadd.f32 %v710, %v818
          %v820 = vpop.f32.mrb[0].mxu0
          %v821 = vpop.f32.mrb[0].mxu0
          %v822 = vadd.f32 %v710, %v821
          %v823 = vpop.f32.mrb[0].mxu0
          %824 = vmatprep.mubr.bf16.mxu0 0
          %825 = vmatmul.mubr.bf16.gmra.mrb[0].mxu0 %v685
          %v826 = vpop.f32.mrb[0].mxu0
          %v827 = vadd.f32 %v710, %v826
          %v828 = vpop.f32.mrb[0].mxu0
          %v829 = vpop.f32.mrb[0].mxu0
          %v830 = vadd.f32 %v710, %v829
          %v831 = vpop.f32.mrb[0].mxu0
          %832 = vmatprep.mubr.bf16.mxu0 0
          %833 = vmatmul.mubr.bf16.gmra.mrb[0].mxu0 %v686
          %v834 = vpop.f32.mrb[0].mxu0
          %v835 = vadd.f32 %v710, %v834
          %v836 = vpop.f32.mrb[0].mxu0
          %v837 = vpop.f32.mrb[0].mxu0
          %v838 = vadd.f32 %v710, %v837
          %v839 = vpop.f32.mrb[0].mxu0
          %840 = vmatprep.mubr.bf16.mxu0 0
          %841 = vmatmul.mubr.bf16.gmra.mrb[0].mxu0 %v687
          %v842 = vpop.f32.mrb[0].mxu0
          %v843 = vadd.f32 %v710, %v842
          %v844 = vpop.f32.mrb[0].mxu0
          %v845 = vpop.f32.mrb[0].mxu0
          %v846 = vadd.f32 %v710, %v845
          %v847 = vpop.f32.mrb[0].mxu0
          %848 = vmatprep.mubr.bf16.mxu0 0
          %849 = vmatmul.mubr.bf16.gmra.mrb[0].mxu0 %v688
          %v850 = vpop.f32.mrb[0].mxu0
          %v851 = vadd.f32 %v710, %v850
          %v852 = vpop.f32.mrb[0].mxu0
          %v853 = vpop.f32.mrb[0].mxu0
          %v854 = vadd.f32 %v710, %v853
          %v855 = vpop.f32.mrb[0].mxu0
          %856 = vdwg.mxu0
          %v857 = vmax.f32 %v795, 0.0
          %v858 = vmax.f32 %v798, 0.0
          %v859 = vmax.f32 %v803, 0.0
          %v860 = vmax.f32 %v806, 0.0
          %v861 = vmax.f32 %v811, 0.0
          %v862 = vmax.f32 %v814, 0.0
          %v863 = vmax.f32 %v819, 0.0
          %v864 = vmax.f32 %v822, 0.0
          %v865 = vmax.f32 %v827, 0.0
          %v866 = vmax.f32 %v830, 0.0
          %v867 = vmax.f32 %v835, 0.0
          %v868 = vmax.f32 %v838, 0.0
          %v869 = vmax.f32 %v843, 0.0
          %v870 = vmax.f32 %v846, 0.0
          %v871 = vmax.f32 %v851, 0.0
          %v872 = vmax.f32 %v854, 0.0
          %v873 = vpack.c.bf16 %v858, %v857
          %v874 = vpack.c.bf16 %v860, %v859
          %v875 = vpack.c.bf16 %v862, %v861
          %v876 = vpack.c.bf16 %v864, %v863
          %v877 = vpack.c.bf16 %v866, %v865
          %v878 = vpack.c.bf16 %v868, %v867
          %v879 = vpack.c.bf16 %v870, %v869
          %v880 = vpack.c.bf16 %v872, %v871
          %v881 = vld [vmem:[%s4] sm:$0xf]
          %v882 = vld [vmem:[%s4 + $0x4] sm:$0xf]
          %v883 = vld [vmem:[%s4 + $0x8] sm:$0xf]
          %v884 = vld [vmem:[%s4 + $0xc] sm:$0xf]
          %v885 = vld [vmem:[%s4 + $0x10] sm:$0xf]
          %v886 = vld [vmem:[%s4 + $0x14] sm:$0xf]
          %v887 = vld [vmem:[%s4 + $0x18] sm:$0xf]
          %v888 = vld [vmem:[%s4 + $0x1c] sm:$0xf]
          %v889 = vld [vmem:[%s4 + $0x20] sm:$0xf]
          %v890 = vld [vmem:[%s4 + $0x24] sm:$0xf]
          %v891 = vld [vmem:[%s4 + $0x28] sm:$0xf]
          %v892 = vld [vmem:[%s4 + $0x2c] sm:$0xf]
          %v893 = vld [vmem:[%s4 + $0x30] sm:$0xf]
          %v894 = vld [vmem:[%s4 + $0x34] sm:$0xf]
          %v895 = vld [vmem:[%s4 + $0x38] sm:$0xf]
          %v896 = vld [vmem:[%s4 + $0x3c] sm:$0xf]
          %v913 = vunpack.c.l.b16 %v881
          %v914 = vunpack.c.l.b16 %v882
          %v915 = vunpack.c.l.b16 %v883
          %v916 = vunpack.c.l.b16 %v884
          %v917 = vunpack.c.l.b16 %v885
          %v918 = vunpack.c.l.b16 %v886
          %v919 = vunpack.c.l.b16 %v887
          %v920 = vunpack.c.l.b16 %v888
          %v921 = vunpack.c.l.b16 %v889
          %v922 = vunpack.c.l.b16 %v890
          %v923 = vunpack.c.l.b16 %v891
          %v924 = vunpack.c.l.b16 %v892
          %v925 = vunpack.c.l.b16 %v893
          %v926 = vunpack.c.l.b16 %v894
          %v927 = vunpack.c.l.b16 %v895
          %v928 = vunpack.c.l.b16 %v896
          %v929 = vpack.c.b16 %v914, %v913
          %v930 = vpack.c.b16 %v916, %v915
          %v931 = vpack.c.b16 %v918, %v917
          %v932 = vpack.c.b16 %v920, %v919
          %v933 = vpack.c.b16 %v922, %v921
          %v934 = vpack.c.b16 %v924, %v923
          %v935 = vpack.c.b16 %v926, %v925
          %v936 = vpack.c.b16 %v928, %v927
          %945 = vmatprep.subr.bf16.mxu0 0
          %946 = vmatpush1.bf16.msra.mxu0 %v929
          %947 = vmatprep.subr.bf16.mxu0 0
          %948 = vmatpush1.bf16.msra.mxu0 %v930
          %949 = vmatprep.subr.bf16.mxu0 0
          %950 = vmatpush1.bf16.msra.mxu0 %v931
          %951 = vmatprep.subr.bf16.mxu0 0
          %952 = vmatpush1.bf16.msra.mxu0 %v932
          %953 = vmatprep.subr.bf16.mxu0 0
          %954 = vmatpush1.bf16.msra.mxu0 %v933
          %955 = vmatprep.subr.bf16.mxu0 0
          %956 = vmatpush1.bf16.msra.mxu0 %v934
          %957 = vmatprep.subr.bf16.mxu0 0
          %958 = vmatpush1.bf16.msra.mxu0 %v935
          %959 = vmatprep.subr.bf16.mxu0 0
          %960 = vmatpush1.bf16.msra.mxu0 %v936
          %961 = vmatprep.subr.bf16.mxu0 0
          %962 = vmatpush1.bf16.msra.mxu0 0
          %963 = vmatprep.subr.bf16.mxu0 0
          %964 = vmatpush1.bf16.msra.mxu0 0
          %965 = vmatprep.subr.bf16.mxu0 0
          %966 = vmatpush1.bf16.msra.mxu0 0
          %967 = vmatprep.subr.bf16.mxu0 0
          %968 = vmatpush1.bf16.msra.mxu0 0
          %969 = vmatprep.subr.bf16.mxu0 0
          %970 = vmatpush1.bf16.msra.mxu0 0
          %971 = vmatprep.subr.bf16.mxu0 0
          %972 = vmatpush1.bf16.msra.mxu0 0
          %973 = vmatprep.subr.bf16.mxu0 0
          %974 = vmatpush1.bf16.msra.mxu0 0
          %975 = vmatprep.subr.bf16.mxu0 0
          %976 = vmatpush1.bf16.msra.mxu0 0
          %977 = vmatprep.mubr.bf16.mxu0 0
          %978 = vmatmul.mubr.bf16.gmra.mrb[0].mxu0 %v873
          %v979 = vpop.f32.mrb[0].mxu0
          %v980 = vadd.f32 0.0, %v979
          %v981 = vpop.f32.mrb[0].mxu0
          %v982 = vpop.f32.mrb[0].mxu0
          %v983 = vadd.f32 0.0, %v982
          %v984 = vpop.f32.mrb[0].mxu0
          %985 = vmatprep.mubr.bf16.mxu0 0
          %986 = vmatmul.mubr.bf16.gmra.mrb[0].mxu0 %v874
          %v987 = vpop.f32.mrb[0].mxu0
          %v988 = vadd.f32 0.0, %v987
          %v989 = vpop.f32.mrb[0].mxu0
          %v990 = vpop.f32.mrb[0].mxu0
          %v991 = vadd.f32 0.0, %v990
          %v992 = vpop.f32.mrb[0].mxu0
          %993 = vmatprep.mubr.bf16.mxu0 0
          %994 = vmatmul.mubr.bf16.gmra.mrb[0].mxu0 %v875
          %v995 = vpop.f32.mrb[0].mxu0
          %v996 = vadd.f32 0.0, %v995
          %v997 = vpop.f32.mrb[0].mxu0
          %v998 = vpop.f32.mrb[0].mxu0
          %v999 = vadd.f32 0.0, %v998
          %v1000 = vpop.f32.mrb[0].mxu0
          %1001 = vmatprep.mubr.bf16.mxu0 0
          %1002 = vmatmul.mubr.bf16.gmra.mrb[0].mxu0 %v876
          %v1003 = vpop.f32.mrb[0].mxu0
          %v1004 = vadd.f32 0.0, %v1003
          %v1005 = vpop.f32.mrb[0].mxu0
          %v1006 = vpop.f32.mrb[0].mxu0
          %v1007 = vadd.f32 0.0, %v1006
          %v1008 = vpop.f32.mrb[0].mxu0
          %1009 = vmatprep.mubr.bf16.mxu0 0
          %1010 = vmatmul.mubr.bf16.gmra.mrb[0].mxu0 %v877
          %v1011 = vpop.f32.mrb[0].mxu0
          %v1012 = vadd.f32 0.0, %v1011
          %v1013 = vpop.f32.mrb[0].mxu0
          %v1014 = vpop.f32.mrb[0].mxu0
          %v1015 = vadd.f32 0.0, %v1014
          %v1016 = vpop.f32.mrb[0].mxu0
          %1017 = vmatprep.mubr.bf16.mxu0 0
          %1018 = vmatmul.mubr.bf16.gmra.mrb[0].mxu0 %v878
          %v1019 = vpop.f32.mrb[0].mxu0
          %v1020 = vadd.f32 0.0, %v1019
          %v1021 = vpop.f32.mrb[0].mxu0
          %v1022 = vpop.f32.mrb[0].mxu0
          %v1023 = vadd.f32 0.0, %v1022
          %v1024 = vpop.f32.mrb[0].mxu0
          %1025 = vmatprep.mubr.bf16.mxu0 0
          %1026 = vmatmul.mubr.bf16.gmra.mrb[0].mxu0 %v879
          %v1027 = vpop.f32.mrb[0].mxu0
          %v1028 = vadd.f32 0.0, %v1027
          %v1029 = vpop.f32.mrb[0].mxu0
          %v1030 = vpop.f32.mrb[0].mxu0
          %v1031 = vadd.f32 0.0, %v1030
          %v1032 = vpop.f32.mrb[0].mxu0
          %1033 = vmatprep.mubr.bf16.mxu0 0
          %1034 = vmatmul.mubr.bf16.gmra.mrb[0].mxu0 %v880
          %v1035 = vpop.f32.mrb[0].mxu0
          %v1036 = vadd.f32 0.0, %v1035
          %v1037 = vpop.f32.mrb[0].mxu0
          %v1038 = vpop.f32.mrb[0].mxu0
          %v1039 = vadd.f32 0.0, %v1038
          %v1040 = vpop.f32.mrb[0].mxu0
          %1041 = vdwg.mxu0
          %v1042 = vpack.c.bf16 %v983, %v980
          %v1043 = vpack.c.bf16 %v991, %v988
          %v1044 = vpack.c.bf16 %v999, %v996
          %v1045 = vpack.c.bf16 %v1007, %v1004
          %v1046 = vpack.c.bf16 %v1015, %v1012
          %v1047 = vpack.c.bf16 %v1023, %v1020
          %v1048 = vpack.c.bf16 %v1031, %v1028
          %v1049 = vpack.c.bf16 %v1039, %v1036
          %v1058 = vunpack.c.l.b16 %v1042
          %v1059 = vunpack.c.h.b16 %v1042
          %v1060 = vunpack.c.l.b16 %v1043
          %v1061 = vunpack.c.h.b16 %v1043
          %v1062 = vunpack.c.l.b16 %v1044
          %v1063 = vunpack.c.h.b16 %v1044
          %v1064 = vunpack.c.l.b16 %v1045
          %v1065 = vunpack.c.h.b16 %v1045
          %v1066 = vunpack.c.l.b16 %v1046
          %v1067 = vunpack.c.h.b16 %v1046
          %v1068 = vunpack.c.l.b16 %v1047
          %v1069 = vunpack.c.h.b16 %v1047
          %v1070 = vunpack.c.l.b16 %v1048
          %v1071 = vunpack.c.h.b16 %v1048
          %v1072 = vunpack.c.l.b16 %v1049
          %v1073 = vunpack.c.h.b16 %v1049
          %v1074 = vpack.c.b16 %v1058, %v1058
          %v1075 = vpack.c.b16 %v1059, %v1059
          %v1076 = vpack.c.b16 %v1060, %v1060
          %v1077 = vpack.c.b16 %v1061, %v1061
          %v1078 = vpack.c.b16 %v1062, %v1062
          %v1079 = vpack.c.b16 %v1063, %v1063
          %v1080 = vpack.c.b16 %v1064, %v1064
          %v1081 = vpack.c.b16 %v1065, %v1065
          %v1082 = vpack.c.b16 %v1066, %v1066
          %v1083 = vpack.c.b16 %v1067, %v1067
          %v1084 = vpack.c.b16 %v1068, %v1068
          %v1085 = vpack.c.b16 %v1069, %v1069
          %v1086 = vpack.c.b16 %v1070, %v1070
          %v1087 = vpack.c.b16 %v1071, %v1071
          %v1088 = vpack.c.b16 %v1072, %v1072
          %v1089 = vpack.c.b16 %v1073, %v1073
          %1106 = vst [vmem:[%s365] sm:$0xf] %v1074
          %1107 = vst [vmem:[%s365 + $0x4] sm:$0xf] %v1075
          %1108 = vst [vmem:[%s365 + $0x8] sm:$0xf] %v1076
          %1109 = vst [vmem:[%s365 + $0xc] sm:$0xf] %v1077
          %1110 = vst [vmem:[%s365 + $0x10] sm:$0xf] %v1078
          %1111 = vst [vmem:[%s365 + $0x14] sm:$0xf] %v1079
          %1112 = vst [vmem:[%s365 + $0x18] sm:$0xf] %v1080
          %1113 = vst [vmem:[%s365 + $0x1c] sm:$0xf] %v1081
          %1114 = vst [vmem:[%s365 + $0x20] sm:$0xf] %v1082
          %1115 = vst [vmem:[%s365 + $0x24] sm:$0xf] %v1083
          %1116 = vst [vmem:[%s365 + $0x28] sm:$0xf] %v1084
          %1117 = vst [vmem:[%s365 + $0x2c] sm:$0xf] %v1085
          %1118 = vst [vmem:[%s365 + $0x30] sm:$0xf] %v1086
          %1119 = vst [vmem:[%s365 + $0x34] sm:$0xf] %v1087
          %1120 = vst [vmem:[%s365 + $0x38] sm:$0xf] %v1088
          %1121 = vst [vmem:[%s365 + $0x3c] sm:$0xf] %v1089
        $region89: #{combine_model_forward.2} parent=76 // pred_fallthru
          _
        %s1122 = smul.u32 16, %s20
        %p1123 = scmp.lt.s32.totalorder %s1122, 31
        %s1124 = scalar_select %p1123, %s1122, 31
        %s1125 = smul.addr %s1124, 4
        %s1126 = scalar_lea.vmem %s5, %s1125
        // Predicated region
        $region90: #{combine_model_forward.2} parent=76 // pred_check
          %p1127 = pneg %p163
        $region91: #{combine_model_forward.2} parent=76 // pred_check_branch
          %1129 = sbr.rel (%p1127) target = $region93
        $region92: #{combine_model_forward.2} parent=76 // pred_region
          %s1130 = smul.u32 16, %s20
        $region93: #{combine_model_forward.2} parent=76 // pred_fallthru
          _
      $region77: #{combine_model_forward.2} parent=5 // pred_fallthru
        _
      %p1131 = scmp.le.s32.totalorder 2, %s11
      // Predicated region
      $region94: #{combine_model_forward.2} parent=5 // pred_check
        %p1132 = pneg %p1131
      $region95: #{combine_model_forward.2} parent=5 // pred_check_branch
        %1134 = sbr.rel (%p1132) target = $region97
      $region96: #{combine_model_forward.2} parent=5 // pred_region
        %s1135 = ssub.s32 %s11, 2
        // Predicated region
        $region98: #{combine_model_forward.2} parent=96 // pred_check
          %p1136 = pneg %p169
        $region99: #{combine_model_forward.2} parent=96 // pred_check_branch
          %1138 = sbr.rel (%p1136) target = $region101
        $region100: #{combine_model_forward.2} parent=96 // pred_region
          %s1139 = smul.u32 16, %s22
          %p1140 = scmp.lt.s32.totalorder %s1139, 31
          %s1141 = scalar_select %p1140, %s1139, 31
          %s1142 = smul.addr %s1141, 4
          %s1143 = scalar_lea.vmem %s5, %s1142
        $region101: #{combine_model_forward.2} parent=96 // pred_fallthru
          _
      $region97: #{combine_model_forward.2} parent=5 // pred_fallthru
        _
    $region6: #{combine_model_forward.2} parent=1 // loop_footer
      %s15 = sadd.s32 1, %s11
    $region7: #{combine_model_forward.2} parent=1 // loop_footer_branch
      %10 = sbr.rel target = $region3
    $region8: #{combine_model_forward.2} parent=1 // loop_exit
      _

// kernel: combine_model_forward.3
$region0: #{combine_model_forward.3}
  #allocation0 [shape = 'u32[]', space=smem, size = 0x4, offset = 0x4, fixed_abs, tag = 'smem constant byte address 0x4 - core index']
  #allocation1 [shape = 'u32[144,128]{1,0:T(1,128)}', space=vmem, size = 0x12000, scoped, tag = 'internal scratch']
  #allocation2 [shape = 'f32[16,128]{1,0:T(8,128)}', space=vmem, size = 0x2000, scoped, tag = 'scratch operand']
  %s0 = inlined_call_operand.vmem [shape: bf16[16,256], index: 0, kind: input, shape index: {}]
  %s1 = inlined_call_operand.vmem [shape: bf16[256,128], index: 1, kind: input, shape index: {}]
  %s2 = inlined_call_operand.vmem [shape: f32[1,128], index: 2, kind: input, shape index: {}]
  %s3 = inlined_call_operand.vmem [shape: bf16[16,16,128], index: 3, kind: input, shape index: {}]
  %s4 = inlined_call_operand.vmem [shape: f32[16,16], index: 4, kind: input, shape index: {}]
  %s5 = inlined_call_operand.vmem [shape: bf16[128,128], index: 5, kind: input, shape index: {}]
  %s6 = inlined_call_operand.vmem [shape: f32[1,128], index: 6, kind: input, shape index: {}]
  %s7 = inlined_call_operand.vmem [shape: bf16[256,128], index: 7, kind: input, shape index: {}]
  %s8 = inlined_call_operand.vmem [shape: f32[1,128], index: 8, kind: input, shape index: {}]
  %s9 = inlined_call_operand.hbm [shape: f32[16,128], index: 9, kind: output, shape index: {}]
  %s10 = sld [smem:[#allocation0]]
  $region118: #{combine_model_forward.3} parent=0
    _
  %s12 = ssub.s32 1, %s10
  %s13 = scalar_select 0, %s12, %s10
  $region1: #{combine_model_forward.3} parent=0
    #allocation3 [shape = 'u8[8192]{0}', space=vmem, size = 0x2000, scoped, tag = 'input window, operand 0']
    #allocation4 [shape = 'u8[8192]{0}', space=vmem, size = 0x2000, scoped, tag = 'output window, operand 0, single buffered']
    #allocation5 [shape = 's32[2]{0}', space=sflag, size = 0x8, scoped, tag = 'scoped memory for combine_model_forward.3']
    %14 = vsyncpa [#allocation5], 0
    loop: start=0, step=1, limit=4
    $region2: #{combine_model_forward.3} parent=1 // loop_pre_header
      _
    $region3: #{combine_model_forward.3} parent=1 // loop_header
      %s16 = sphi 0, %s20
      %p17 = scmp.ge.s32.totalorder %s16, 4
      %s26 = sphi 0, %s28
      %s29 = sphi 0, %s26
      %s30 = sphi 0, %s29
      %s46 = sphi 0, %s30
      %s52 = sphi 0, %s54
      %s55 = sphi 0, %s52
      %s56 = sphi 0, %s55
      %s72 = sphi 0, %s56
      %s76 = sphi 0, %s76
      %s78 = sphi 0, %s76
      %s79 = sphi 0, %s78
      %s93 = sphi 0, %s79
      %s97 = sphi 0, %s97
      %s99 = sphi 0, %s97
      %s100 = sphi 0, %s99
      %s114 = sphi 0, %s100
      %s118 = sphi 0, %s118
      %s120 = sphi 0, %s118
      %s121 = sphi 0, %s120
      %s135 = sphi 0, %s121
      %s139 = sphi 0, %s139
      %s141 = sphi 0, %s139
      %s142 = sphi 0, %s141
      %s156 = sphi 0, %s142
      %s160 = sphi 0, %s160
      %s162 = sphi 0, %s160
      %s163 = sphi 0, %s162
      %s177 = sphi 0, %s163
      %s181 = sphi 0, %s181
      %s183 = sphi 0, %s181
      %s184 = sphi 0, %s183
      %s198 = sphi 0, %s184
      %s202 = sphi 0, %s202
      %s204 = sphi 0, %s202
      %s205 = sphi 0, %s204
      %s219 = sphi 0, %s205
      %s223 = sphi 0, %s223
      %s225 = sphi 0, %s223
      %s226 = sphi 0, %s225
      %s240 = sphi 0, %s226
    $region4: #{combine_model_forward.3} parent=1 // loop_header_branch
      %19 = sbr.rel (%p17) target = $region8
    $region5: #{combine_model_forward.3} parent=1 // loop_body
      %s21 = ssub.s32 %s16, 1
      %s22 = ssub.s32 %s16, 2
      %s23 = sadd.s32 %s16, 1
      %s24 = ssub.s32 %s16, %s23
      %p25 = scmp.eq.s32.totalorder %s24, 0
      %s27 = sadd.s32 %s26, 1
      %s28 = scalar_select %p25, %s26, %s27
      %p31 = pneg %p25
      %p32 = scmp.eq.s32.totalorder %s16, 1
      %p33 = por %p31, %p32
      %p34 = scmp.ne.s32.totalorder %s26, %s29
      %p35 = scmp.eq.s32.totalorder %s16, 0
      %p36 = por %p34, %p35
      %p37 = scmp.ne.s32.totalorder %s26, %s29
      %p38 = scmp.eq.s32.totalorder %s21, 1
      %p39 = por %p37, %p38
      %p40 = scmp.ne.s32.totalorder %s29, %s30
      %p41 = scmp.eq.s32.totalorder %s21, 0
      %p42 = por %p40, %p41
      %p43 = scmp.ne.s32.totalorder %s29, %s30
      %p44 = scmp.eq.s32.totalorder %s22, 1
      %p45 = por %p43, %p44
      %p47 = scmp.ne.s32.totalorder %s30, %s46
      %p48 = scmp.eq.s32.totalorder %s22, 0
      %p49 = por %p47, %p48
      %s50 = ssub.s32 %s16, %s23
      %p51 = scmp.eq.s32.totalorder %s50, 0
      %s53 = sadd.s32 %s52, 1
      %s54 = scalar_select %p51, %s52, %s53
      %p57 = pneg %p51
      %p58 = scmp.eq.s32.totalorder %s16, 1
      %p59 = por %p57, %p58
      %p60 = scmp.ne.s32.totalorder %s52, %s55
      %p61 = scmp.eq.s32.totalorder %s16, 0
      %p62 = por %p60, %p61
      %p63 = scmp.ne.s32.totalorder %s52, %s55
      %p64 = scmp.eq.s32.totalorder %s21, 1
      %p65 = por %p63, %p64
      %p66 = scmp.ne.s32.totalorder %s55, %s56
      %p67 = scmp.eq.s32.totalorder %s21, 0
      %p68 = por %p66, %p67
      %p69 = scmp.ne.s32.totalorder %s55, %s56
      %p70 = scmp.eq.s32.totalorder %s22, 1
      %p71 = por %p69, %p70
      %p73 = scmp.ne.s32.totalorder %s56, %s72
      %p74 = scmp.eq.s32.totalorder %s22, 0
      %p75 = por %p73, %p74
      %s77 = sadd.s32 %s76, 1
      %p80 = scmp.eq.s32.totalorder %s16, 1
      %p81 = scmp.ne.s32.totalorder %s76, %s78
      %p82 = scmp.eq.s32.totalorder %s16, 0
      %p83 = por %p81, %p82
      %p84 = scmp.ne.s32.totalorder %s76, %s78
      %p85 = scmp.eq.s32.totalorder %s21, 1
      %p86 = por %p84, %p85
      %p87 = scmp.ne.s32.totalorder %s78, %s79
      %p88 = scmp.eq.s32.totalorder %s21, 0
      %p89 = por %p87, %p88
      %p90 = scmp.ne.s32.totalorder %s78, %s79
      %p91 = scmp.eq.s32.totalorder %s22, 1
      %p92 = por %p90, %p91
      %p94 = scmp.ne.s32.totalorder %s79, %s93
      %p95 = scmp.eq.s32.totalorder %s22, 0
      %p96 = por %p94, %p95
      %s98 = sadd.s32 %s97, 1
      %p101 = scmp.eq.s32.totalorder %s16, 1
      %p102 = scmp.ne.s32.totalorder %s97, %s99
      %p103 = scmp.eq.s32.totalorder %s16, 0
      %p104 = por %p102, %p103
      %p105 = scmp.ne.s32.totalorder %s97, %s99
      %p106 = scmp.eq.s32.totalorder %s21, 1
      %p107 = por %p105, %p106
      %p108 = scmp.ne.s32.totalorder %s99, %s100
      %p109 = scmp.eq.s32.totalorder %s21, 0
      %p110 = por %p108, %p109
      %p111 = scmp.ne.s32.totalorder %s99, %s100
      %p112 = scmp.eq.s32.totalorder %s22, 1
      %p113 = por %p111, %p112
      %p115 = scmp.ne.s32.totalorder %s100, %s114
      %p116 = scmp.eq.s32.totalorder %s22, 0
      %p117 = por %p115, %p116
      %s119 = sadd.s32 %s118, 1
      %p122 = scmp.eq.s32.totalorder %s16, 1
      %p123 = scmp.ne.s32.totalorder %s118, %s120
      %p124 = scmp.eq.s32.totalorder %s16, 0
      %p125 = por %p123, %p124
      %p126 = scmp.ne.s32.totalorder %s118, %s120
      %p127 = scmp.eq.s32.totalorder %s21, 1
      %p128 = por %p126, %p127
      %p129 = scmp.ne.s32.totalorder %s120, %s121
      %p130 = scmp.eq.s32.totalorder %s21, 0
      %p131 = por %p129, %p130
      %p132 = scmp.ne.s32.totalorder %s120, %s121
      %p133 = scmp.eq.s32.totalorder %s22, 1
      %p134 = por %p132, %p133
      %p136 = scmp.ne.s32.totalorder %s121, %s135
      %p137 = scmp.eq.s32.totalorder %s22, 0
      %p138 = por %p136, %p137
      %s140 = sadd.s32 %s139, 1
      %p143 = scmp.eq.s32.totalorder %s16, 1
      %p144 = scmp.ne.s32.totalorder %s139, %s141
      %p145 = scmp.eq.s32.totalorder %s16, 0
      %p146 = por %p144, %p145
      %p147 = scmp.ne.s32.totalorder %s139, %s141
      %p148 = scmp.eq.s32.totalorder %s21, 1
      %p149 = por %p147, %p148
      %p150 = scmp.ne.s32.totalorder %s141, %s142
      %p151 = scmp.eq.s32.totalorder %s21, 0
      %p152 = por %p150, %p151
      %p153 = scmp.ne.s32.totalorder %s141, %s142
      %p154 = scmp.eq.s32.totalorder %s22, 1
      %p155 = por %p153, %p154
      %p157 = scmp.ne.s32.totalorder %s142, %s156
      %p158 = scmp.eq.s32.totalorder %s22, 0
      %p159 = por %p157, %p158
      %s161 = sadd.s32 %s160, 1
      %p164 = scmp.eq.s32.totalorder %s16, 1
      %p165 = scmp.ne.s32.totalorder %s160, %s162
      %p166 = scmp.eq.s32.totalorder %s16, 0
      %p167 = por %p165, %p166
      %p168 = scmp.ne.s32.totalorder %s160, %s162
      %p169 = scmp.eq.s32.totalorder %s21, 1
      %p170 = por %p168, %p169
      %p171 = scmp.ne.s32.totalorder %s162, %s163
      %p172 = scmp.eq.s32.totalorder %s21, 0
      %p173 = por %p171, %p172
      %p174 = scmp.ne.s32.totalorder %s162, %s163
      %p175 = scmp.eq.s32.totalorder %s22, 1
      %p176 = por %p174, %p175
      %p178 = scmp.ne.s32.totalorder %s163, %s177
      %p179 = scmp.eq.s32.totalorder %s22, 0
      %p180 = por %p178, %p179
      %s182 = sadd.s32 %s181, 1
      %p185 = scmp.eq.s32.totalorder %s16, 1
      %p186 = scmp.ne.s32.totalorder %s181, %s183
      %p187 = scmp.eq.s32.totalorder %s16, 0
      %p188 = por %p186, %p187
      %p189 = scmp.ne.s32.totalorder %s181, %s183
      %p190 = scmp.eq.s32.totalorder %s21, 1
      %p191 = por %p189, %p190
      %p192 = scmp.ne.s32.totalorder %s183, %s184
      %p193 = scmp.eq.s32.totalorder %s21, 0
      %p194 = por %p192, %p193
      %p195 = scmp.ne.s32.totalorder %s183, %s184
      %p196 = scmp.eq.s32.totalorder %s22, 1
      %p197 = por %p195, %p196
      %p199 = scmp.ne.s32.totalorder %s184, %s198
      %p200 = scmp.eq.s32.totalorder %s22, 0
      %p201 = por %p199, %p200
      %s203 = sadd.s32 %s202, 1
      %p206 = scmp.eq.s32.totalorder %s16, 1
      %p207 = scmp.ne.s32.totalorder %s202, %s204
      %p208 = scmp.eq.s32.totalorder %s16, 0
      %p209 = por %p207, %p208
      %p210 = scmp.ne.s32.totalorder %s202, %s204
      %p211 = scmp.eq.s32.totalorder %s21, 1
      %p212 = por %p210, %p211
      %p213 = scmp.ne.s32.totalorder %s204, %s205
      %p214 = scmp.eq.s32.totalorder %s21, 0
      %p215 = por %p213, %p214
      %p216 = scmp.ne.s32.totalorder %s204, %s205
      %p217 = scmp.eq.s32.totalorder %s22, 1
      %p218 = por %p216, %p217
      %p220 = scmp.ne.s32.totalorder %s205, %s219
      %p221 = scmp.eq.s32.totalorder %s22, 0
      %p222 = por %p220, %p221
      %s224 = sadd.s32 %s223, 1
      %p227 = scmp.eq.s32.totalorder %s16, 1
      %p228 = scmp.ne.s32.totalorder %s223, %s225
      %p229 = scmp.eq.s32.totalorder %s16, 0
      %p230 = por %p228, %p229
      %p231 = scmp.ne.s32.totalorder %s223, %s225
      %p232 = scmp.eq.s32.totalorder %s21, 1
      %p233 = por %p231, %p232
      %p234 = scmp.ne.s32.totalorder %s225, %s226
      %p235 = scmp.eq.s32.totalorder %s21, 0
      %p236 = por %p234, %p235
      %p237 = scmp.ne.s32.totalorder %s225, %s226
      %p238 = scmp.eq.s32.totalorder %s22, 1
      %p239 = por %p237, %p238
      %p241 = scmp.ne.s32.totalorder %s226, %s240
      %p242 = scmp.eq.s32.totalorder %s22, 0
      %p243 = por %p241, %p242
      %p244 = scmp.le.s32.totalorder 1, %s16
      %p245 = scmp.lt.s32.totalorder %s16, 3
      %p246 = pnand %p244, %p245
      %p247 = pneg %p246
      // Predicated region
      $region9: #{combine_model_forward.3} parent=5 // pred_check
        _
      $region10: #{combine_model_forward.3} parent=5 // pred_check_branch
        %249 = sbr.rel (%p246) target = $region12
      $region11: #{combine_model_forward.3} parent=5 // pred_region
        %s250 = ssub.s32 %s16, 1
        // Predicated region
        $region13: #{combine_model_forward.3} parent=11 // pred_check
          %p251 = pneg %p89
        $region14: #{combine_model_forward.3} parent=11 // pred_check_branch
          %253 = sbr.rel (%p251) target = $region16
        $region15: #{combine_model_forward.3} parent=11 // pred_region
          _
        $region16: #{combine_model_forward.3} parent=11 // pred_fallthru
          _
        // Predicated region
        $region17: #{combine_model_forward.3} parent=11 // pred_check
          %p254 = pneg %p110
        $region18: #{combine_model_forward.3} parent=11 // pred_check_branch
          %256 = sbr.rel (%p254) target = $region20
        $region19: #{combine_model_forward.3} parent=11 // pred_region
          _
        $region20: #{combine_model_forward.3} parent=11 // pred_fallthru
          _
        // Predicated region
        $region21: #{combine_model_forward.3} parent=11 // pred_check
          %p257 = pneg %p131
        $region22: #{combine_model_forward.3} parent=11 // pred_check_branch
          %259 = sbr.rel (%p257) target = $region24
        $region23: #{combine_model_forward.3} parent=11 // pred_region
          _
        $region24: #{combine_model_forward.3} parent=11 // pred_fallthru
          _
        // Predicated region
        $region25: #{combine_model_forward.3} parent=11 // pred_check
          %p260 = pneg %p152
        $region26: #{combine_model_forward.3} parent=11 // pred_check_branch
          %262 = sbr.rel (%p260) target = $region28
        $region27: #{combine_model_forward.3} parent=11 // pred_region
          _
        $region28: #{combine_model_forward.3} parent=11 // pred_fallthru
          _
        // Predicated region
        $region29: #{combine_model_forward.3} parent=11 // pred_check
          %p263 = pneg %p173
        $region30: #{combine_model_forward.3} parent=11 // pred_check_branch
          %265 = sbr.rel (%p263) target = $region32
        $region31: #{combine_model_forward.3} parent=11 // pred_region
          _
        $region32: #{combine_model_forward.3} parent=11 // pred_fallthru
          _
        // Predicated region
        $region33: #{combine_model_forward.3} parent=11 // pred_check
          %p266 = pneg %p194
        $region34: #{combine_model_forward.3} parent=11 // pred_check_branch
          %268 = sbr.rel (%p266) target = $region36
        $region35: #{combine_model_forward.3} parent=11 // pred_region
          _
        $region36: #{combine_model_forward.3} parent=11 // pred_fallthru
          _
        // Predicated region
        $region37: #{combine_model_forward.3} parent=11 // pred_check
          %p269 = pneg %p215
        $region38: #{combine_model_forward.3} parent=11 // pred_check_branch
          %271 = sbr.rel (%p269) target = $region40
        $region39: #{combine_model_forward.3} parent=11 // pred_region
          _
        $region40: #{combine_model_forward.3} parent=11 // pred_fallthru
          _
      $region12: #{combine_model_forward.3} parent=5 // pred_fallthru
        _
      %p272 = scmp.lt.s32.totalorder %s16, 2
      // Predicated region
      $region41: #{combine_model_forward.3} parent=5 // pred_check
        %p273 = pneg %p272
      $region42: #{combine_model_forward.3} parent=5 // pred_check_branch
        %275 = sbr.rel (%p273) target = $region44
      $region43: #{combine_model_forward.3} parent=5 // pred_region
        // Predicated region
        $region45: #{combine_model_forward.3} parent=43 // pred_check
          %p276 = pneg %p36
        $region46: #{combine_model_forward.3} parent=43 // pred_check_branch
          %278 = sbr.rel (%p276) target = $region48
        $region47: #{combine_model_forward.3} parent=43 // pred_region
          %s279 = sand.u32 %s26, 1
          %s280 = sand.u32 %s26, 1
          %s281 = smul.addr %s280, 8
          %s282 = scalar_lea.vmem [#allocation3], %s281
          %s283 = smul.addr %s16, 4
          %s284 = scalar_lea.vmem %s0, %s283
          // Predicated region
          $region49: #{combine_model_forward.3} parent=47 // pred_check
            _
          $region50: #{combine_model_forward.3} parent=47 // pred_check_branch
            %286 = sbr.rel (0) target = $region52
          $region51: #{combine_model_forward.3} parent=47 // pred_region
            // Predicated region
            $region53: #{combine_model_forward.3} parent=51 // pred_check
              _
            $region54: #{combine_model_forward.3} parent=51 // pred_check_branch
              %288 = sbr.rel target = $region56
            $region55: #{combine_model_forward.3} parent=51 // pred_region
              // Predicated region
              $region68: #{combine_model_forward.3} parent=55 // pred_check
                _
              $region69: #{combine_model_forward.3} parent=55 // pred_check_branch
                %305 = sbr.rel (0) target = $region71
              $region70: #{combine_model_forward.3} parent=55 // pred_region
                loop: start=0, step=1, limit=1
                $region72: #{combine_model_forward.3} parent=70 // loop_pre_header
                  _
                $region73: #{combine_model_forward.3} parent=70 // loop_header
                  %s307 = sphi 0, %s311
                  %p308 = scmp.ge.s32.totalorder %s307, 1
                  %s312 = sphi %s284, %s284
                  %s313 = sphi %s282, %s282
                $region74: #{combine_model_forward.3} parent=70 // loop_header_branch
                  %310 = sbr.rel (%p308) target = $region78
                $region75: #{combine_model_forward.3} parent=70 // loop_body
                  _
                $region76: #{combine_model_forward.3} parent=70 // loop_footer
                  %s311 = sadd.s32 1, %s307
                $region77: #{combine_model_forward.3} parent=70 // loop_footer_branch
                  %306 = sbr.rel target = $region73
                $region78: #{combine_model_forward.3} parent=70 // loop_exit
                  _
                loop: start=0, step=1, limit=1
                $region79: #{combine_model_forward.3} parent=70 // loop_pre_header
                  _
                $region80: #{combine_model_forward.3} parent=70 // loop_header
                  %s316 = sphi 0, %s320
                  %p317 = scmp.ge.s32.totalorder %s316, 1
                  %s321 = sphi %s284, %s284
                  %s322 = sphi %s282, %s282
                $region81: #{combine_model_forward.3} parent=70 // loop_header_branch
                  %319 = sbr.rel (%p317) target = $region85
                $region82: #{combine_model_forward.3} parent=70 // loop_body
                  %v323 = vld [vmem:[%s321] sm:$0xf]
                  %324 = vst [vmem:[%s322] sm:$0xf] %v323
                  %v325 = vld [vmem:[%s321 + $0x8] sm:$0xf]
                  %326 = vst [vmem:[%s322 + $0x4] sm:$0xf] %v325
                $region83: #{combine_model_forward.3} parent=70 // loop_footer
                  %s320 = sadd.s32 1, %s316
                $region84: #{combine_model_forward.3} parent=70 // loop_footer_branch
                  %315 = sbr.rel target = $region80
                $region85: #{combine_model_forward.3} parent=70 // loop_exit
                  _
              $region71: #{combine_model_forward.3} parent=55 // pred_fallthru
                _
            $region56: #{combine_model_forward.3} parent=51 // pred_fallthru
              _
            // Predicated region
            $region57: #{combine_model_forward.3} parent=51 // pred_check
              _
            $region58: #{combine_model_forward.3} parent=51 // pred_check_branch
              %290 = sbr.rel (0) target = $region60
            $region59: #{combine_model_forward.3} parent=51 // pred_region
              loop: start=0, step=1, limit=1
              $region61: #{combine_model_forward.3} parent=59 // loop_pre_header
                _
              $region62: #{combine_model_forward.3} parent=59 // loop_header
                %s293 = sphi 0, %s297
                %p294 = scmp.ge.s32.totalorder %s293, 1
                %s298 = sphi %s284, %s284
                %s299 = sphi %s282, %s282
              $region63: #{combine_model_forward.3} parent=59 // loop_header_branch
                %296 = sbr.rel (%p294) target = $region67
              $region64: #{combine_model_forward.3} parent=59 // loop_body
                %v300 = vld [vmem:[%s298] sm:$0xf]
                %301 = vst [vmem:[%s299] sm:$0xf] %v300
                %v302 = vld [vmem:[%s298 + $0x8] sm:$0xf]
                %303 = vst [vmem:[%s299 + $0x4] sm:$0xf] %v302
              $region65: #{combine_model_forward.3} parent=59 // loop_footer
                %s297 = sadd.s32 1, %s293
              $region66: #{combine_model_forward.3} parent=59 // loop_footer_branch
                %292 = sbr.rel target = $region62
              $region67: #{combine_model_forward.3} parent=59 // loop_exit
                _
            $region60: #{combine_model_forward.3} parent=51 // pred_fallthru
              _
          $region52: #{combine_model_forward.3} parent=47 // pred_fallthru
            _
          %327 = vnop
        $region48: #{combine_model_forward.3} parent=43 // pred_fallthru
          _
        // Predicated region
        $region86: #{combine_model_forward.3} parent=43 // pred_check
          %p328 = pneg %p62
        $region87: #{combine_model_forward.3} parent=43 // pred_check_branch
          %330 = sbr.rel (%p328) target = $region89
        $region88: #{combine_model_forward.3} parent=43 // pred_region
          %s331 = smul.u32 16, %s16
          %p332 = scmp.lt.s32.totalorder %s331, 31
          %s333 = scalar_select %p332, %s331, 31
          %s334 = smul.addr %s333, 4
          %s335 = scalar_lea.vmem %s1, %s334
          %s336 = smul.u32 16, %s16
        $region89: #{combine_model_forward.3} parent=43 // pred_fallthru
          _
      $region44: #{combine_model_forward.3} parent=5 // pred_fallthru
        _
      %p337 = scmp.le.s32.totalorder 1, %s16
      %p338 = scmp.lt.s32.totalorder %s16, 3
      %p339 = pnand %p337, %p338
      %p340 = pneg %p339
      // Predicated region
      $region90: #{combine_model_forward.3} parent=5 // pred_check
        _
      $region91: #{combine_model_forward.3} parent=5 // pred_check_branch
        %342 = sbr.rel (%p339) target = $region93
      $region92: #{combine_model_forward.3} parent=5 // pred_region
        %s343 = ssub.s32 %s16, 1
        %s344 = sand.u32 %s29, 1
        %s345 = sand.u32 %s29, 1
        %s346 = smul.addr %s345, 8
        %s347 = scalar_lea.vmem [#allocation3], %s346
        // Predicated region
        $region94: #{combine_model_forward.3} parent=92 // pred_check
          %p348 = pneg %p42
        $region95: #{combine_model_forward.3} parent=92 // pred_check_branch
          %350 = sbr.rel (%p348) target = $region97
        $region96: #{combine_model_forward.3} parent=92 // pred_region
          _
        $region97: #{combine_model_forward.3} parent=92 // pred_fallthru
          _
        %s351 = sand.u32 %s29, 1
        %s352 = sand.u32 %s29, 1
        %s353 = smul.addr %s352, 8
        %s354 = scalar_lea.vmem [#allocation3], %s353
        %p355 = pneg %p42
        %p356 = pneg %p39
        %s357 = smul.u32 16, %s21
        %p358 = scmp.lt.s32.totalorder %s357, 31
        %s359 = scalar_select %p358, %s357, 31
        %s360 = smul.addr %s359, 4
        %s361 = scalar_lea.vmem %s1, %s360
        %p362 = pneg %p68
        %p363 = pneg %p65
        %p364 = pneg %p89
        %p365 = pneg %p86
        %p366 = pneg %p110
        %p367 = pneg %p107
        %p368 = pneg %p131
        %p369 = pneg %p128
        %p370 = pneg %p152
        %p371 = pneg %p149
        %p372 = pneg %p173
        %p373 = pneg %p170
        %p374 = pneg %p194
        %p375 = pneg %p191
        %p376 = pneg %p215
        %p377 = pneg %p212
        %p378 = pneg %p236
        %p379 = pneg %p233
        %s380 = smul.u32 16, %s21
        %p381 = scmp.lt.s32.totalorder %s380, 31
        %s382 = scalar_select %p381, %s380, 31
        %s383 = smul.addr %s382, 4
        %s384 = scalar_lea.vmem %s1, %s383
        %s385 = smul.u32 16, %s21
        %p387 = scmp.eq.s32.totalorder %s21, 0
        // Predicated region
        $region98: #{combine_model_forward.3} parent=92 // pred_check
          %p388 = pneg %p387
        $region99: #{combine_model_forward.3} parent=92 // pred_check_branch
          %390 = sbr.rel (%p388) target = $region101
        $region100: #{combine_model_forward.3} parent=92 // pred_region
          %391 = vst [vmem:[#allocation2] sm:$0xff] 0.0
          %392 = vst [vmem:[#allocation2 + $0x8] sm:$0xff] 0.0
        $region101: #{combine_model_forward.3} parent=92 // pred_fallthru
          _
        %v393 = vld [vmem:[#allocation2] sm:$0xff]
        %v394 = vld [vmem:[#allocation2 + $0x8] sm:$0xff]
        %v395 = vld [vmem:[%s347] sm:$0xf]
        %v396 = vld [vmem:[%s347 + $0x4] sm:$0xf]
        %v397 = vld [vmem:[%s384] sm:$0xf]
        %v398 = vld [vmem:[%s384 + $0x4] sm:$0xf]
        %v399 = vld [vmem:[%s384 + $0x8] sm:$0xf]
        %v400 = vld [vmem:[%s384 + $0xc] sm:$0xf]
        %v401 = vld [vmem:[%s384 + $0x10] sm:$0xf]
        %v402 = vld [vmem:[%s384 + $0x14] sm:$0xf]
        %v403 = vld [vmem:[%s384 + $0x18] sm:$0xf]
        %v404 = vld [vmem:[%s384 + $0x1c] sm:$0xf]
        %v405 = vld [vmem:[%s384 + $0x20] sm:$0xf]
        %v406 = vld [vmem:[%s384 + $0x24] sm:$0xf]
        %v407 = vld [vmem:[%s384 + $0x28] sm:$0xf]
        %v408 = vld [vmem:[%s384 + $0x2c] sm:$0xf]
        %v409 = vld [vmem:[%s384 + $0x30] sm:$0xf]
        %v410 = vld [vmem:[%s384 + $0x34] sm:$0xf]
        %v411 = vld [vmem:[%s384 + $0x38] sm:$0xf]
        %v412 = vld [vmem:[%s384 + $0x3c] sm:$0xf]
        %v415 = vunpack.c.l.b16 %v395
        %v416 = vunpack.c.l.b16 %v396
        %v417 = vpack.c.b16 %v416, %v415
        %v435 = vunpack.c.l.b16 %v397
        %v436 = vunpack.c.l.b16 %v398
        %v437 = vunpack.c.l.b16 %v399
        %v438 = vunpack.c.l.b16 %v400
        %v439 = vunpack.c.l.b16 %v401
        %v440 = vunpack.c.l.b16 %v402
        %v441 = vunpack.c.l.b16 %v403
        %v442 = vunpack.c.l.b16 %v404
        %v443 = vunpack.c.l.b16 %v405
        %v444 = vunpack.c.l.b16 %v406
        %v445 = vunpack.c.l.b16 %v407
        %v446 = vunpack.c.l.b16 %v408
        %v447 = vunpack.c.l.b16 %v409
        %v448 = vunpack.c.l.b16 %v410
        %v449 = vunpack.c.l.b16 %v411
        %v450 = vunpack.c.l.b16 %v412
        %v451 = vpack.c.b16 %v436, %v435
        %v452 = vpack.c.b16 %v438, %v437
        %v453 = vpack.c.b16 %v440, %v439
        %v454 = vpack.c.b16 %v442, %v441
        %v455 = vpack.c.b16 %v444, %v443
        %v456 = vpack.c.b16 %v446, %v445
        %v457 = vpack.c.b16 %v448, %v447
        %v458 = vpack.c.b16 %v450, %v449
        %467 = vmatprep.subr.bf16.mxu0 0
        %468 = vmatpush1.bf16.msra.mxu0 %v451
        %469 = vmatprep.subr.bf16.mxu0 0
        %470 = vmatpush1.bf16.msra.mxu0 %v452
        %471 = vmatprep.subr.bf16.mxu0 0
        %472 = vmatpush1.bf16.msra.mxu0 %v453
        %473 = vmatprep.subr.bf16.mxu0 0
        %474 = vmatpush1.bf16.msra.mxu0 %v454
        %475 = vmatprep.subr.bf16.mxu0 0
        %476 = vmatpush1.bf16.msra.mxu0 %v455
        %477 = vmatprep.subr.bf16.mxu0 0
        %478 = vmatpush1.bf16.msra.mxu0 %v456
        %479 = vmatprep.subr.bf16.mxu0 0
        %480 = vmatpush1.bf16.msra.mxu0 %v457
        %481 = vmatprep.subr.bf16.mxu0 0
        %482 = vmatpush1.bf16.msra.mxu0 %v458
        %483 = vmatprep.subr.bf16.mxu0 0
        %484 = vmatpush1.bf16.msra.mxu0 0
        %485 = vmatprep.subr.bf16.mxu0 0
        %486 = vmatpush1.bf16.msra.mxu0 0
        %487 = vmatprep.subr.bf16.mxu0 0
        %488 = vmatpush1.bf16.msra.mxu0 0
        %489 = vmatprep.subr.bf16.mxu0 0
        %490 = vmatpush1.bf16.msra.mxu0 0
        %491 = vmatprep.subr.bf16.mxu0 0
        %492 = vmatpush1.bf16.msra.mxu0 0
        %493 = vmatprep.subr.bf16.mxu0 0
        %494 = vmatpush1.bf16.msra.mxu0 0
        %495 = vmatprep.subr.bf16.mxu0 0
        %496 = vmatpush1.bf16.msra.mxu0 0
        %497 = vmatprep.subr.bf16.mxu0 0
        %498 = vmatpush1.bf16.msra.mxu0 0
        %499 = vmatprep.mubr.bf16.mxu0 0
        %500 = vmatmul.mubr.bf16.gmra.mrb[0].mxu0 %v417
        %v501 = vpop.f32.mrb[0].mxu0
        %v502 = vadd.f32 0.0, %v501
        %v503 = vpop.f32.mrb[0].mxu0
        %v504 = vpop.f32.mrb[0].mxu0
        %v505 = vadd.f32 0.0, %v504
        %v506 = vpop.f32.mrb[0].mxu0
        %507 = vdwg.mxu0
        %v508 = vadd.f32 %v393, %v502
        %v509 = vadd.f32 %v394, %v505
        %510 = vst [vmem:[#allocation2] sm:$0xff] %v508
        %511 = vst [vmem:[#allocation2 + $0x8] sm:$0xff] %v509
        %p512 = scmp.eq.s32.totalorder %s21, 1
        // Predicated region
        $region102: #{combine_model_forward.3} parent=92 // pred_check
          %p513 = pneg %p512
        $region103: #{combine_model_forward.3} parent=92 // pred_check_branch
          %515 = sbr.rel (%p513) target = $region105
        $region104: #{combine_model_forward.3} parent=92 // pred_region
          %v516 = vld [vmem:[#allocation2] sm:$0xff]
          %v517 = vld [vmem:[#allocation2 + $0x8] sm:$0xff]
          %v518 = vld [vmem:[%s2] sm:$0x1]
          %v520 = vlaneseq
          %v521 = vshrl.u32 %v520, 7
          %v522 = vsub.s32 0, %v521
          %v523 = vrot.slane %v518, %v522
          %v525 = vadd.f32 %v516, %v523
          %v526 = vadd.f32 %v517, %v523
          %v527 = vld [vmem:[%s4] sm:$0xff]
          %v528 = vld [vmem:[%s4 + $0x8] sm:$0xff]
          %vm529 = vcmask 130048
          %v530 = vsel %vm529, %v527, 0.0
          %531 = vadd.xlane.f32.xlu0 %v530
          %v532 = vpop.xlane.xlu0 %531
          %v533 = vsel %vm529, %v528, 0.0
          %534 = vadd.xlane.f32.xlu0 %v533
          %v535 = vpop.xlane.xlu0 %534
          %v536 = vmax.f32 %v532, 1.0
          %v537 = vmax.f32 %v535, 1.0
          %v538 = vrcp.pop %v536
          %v539 = vrcp.pop %v537
          %v540 = vmul.f32 %v527, %v538
          %v541 = vmul.f32 %v528, %v539
          %v542 = vld [vmem:[%s3] sm:$0xf]
          %v543 = vld [vmem:[%s3 + $0x4] sm:$0xf]
          %v544 = vld [vmem:[%s3 + $0x8] sm:$0xf]
          %v545 = vld [vmem:[%s3 + $0xc] sm:$0xf]
          %v546 = vld [vmem:[%s3 + $0x10] sm:$0xf]
          %v547 = vld [vmem:[%s3 + $0x14] sm:$0xf]
          %v548 = vld [vmem:[%s3 + $0x18] sm:$0xf]
          %v549 = vld [vmem:[%s3 + $0x1c] sm:$0xf]
          %v550 = vld [vmem:[%s3 + $0x20] sm:$0xf]
          %v551 = vld [vmem:[%s3 + $0x24] sm:$0xf]
          %v552 = vld [vmem:[%s3 + $0x28] sm:$0xf]
          %v553 = vld [vmem:[%s3 + $0x2c] sm:$0xf]
          %v554 = vld [vmem:[%s3 + $0x30] sm:$0xf]
          %v555 = vld [vmem:[%s3 + $0x34] sm:$0xf]
          %v556 = vld [vmem:[%s3 + $0x38] sm:$0xf]
          %v557 = vld [vmem:[%s3 + $0x3c] sm:$0xf]
          %v558 = vld [vmem:[%s3 + $0x40] sm:$0xf]
          %v559 = vld [vmem:[%s3 + $0x44] sm:$0xf]
          %v560 = vld [vmem:[%s3 + $0x48] sm:$0xf]
          %v561 = vld [vmem:[%s3 + $0x4c] sm:$0xf]
          %v562 = vld [vmem:[%s3 + $0x50] sm:$0xf]
          %v563 = vld [vmem:[%s3 + $0x54] sm:$0xf]
          %v564 = vld [vmem:[%s3 + $0x58] sm:$0xf]
          %v565 = vld [vmem:[%s3 + $0x5c] sm:$0xf]
          %v566 = vld [vmem:[%s3 + $0x60] sm:$0xf]
          %v567 = vld [vmem:[%s3 + $0x64] sm:$0xf]
          %v568 = vld [vmem:[%s3 + $0x68] sm:$0xf]
          %v569 = vld [vmem:[%s3 + $0x6c] sm:$0xf]
          %v570 = vld [vmem:[%s3 + $0x70] sm:$0xf]
          %v571 = vld [vmem:[%s3 + $0x74] sm:$0xf]
          %v572 = vld [vmem:[%s3 + $0x78] sm:$0xf]
          %v573 = vld [vmem:[%s3 + $0x7c] sm:$0xf]
          %v574 = vunpack.c.l.bf16 %v542
          %v575 = vunpack.c.l.bf16 %v543
          %v576 = vunpack.c.l.bf16 %v544
          %v577 = vunpack.c.l.bf16 %v545
          %v578 = vunpack.c.l.bf16 %v546
          %v579 = vunpack.c.l.bf16 %v547
          %v580 = vunpack.c.l.bf16 %v548
          %v581 = vunpack.c.l.bf16 %v549
          %v582 = vunpack.c.l.bf16 %v550
          %v583 = vunpack.c.l.bf16 %v551
          %v584 = vunpack.c.l.bf16 %v552
          %v585 = vunpack.c.l.bf16 %v553
          %v586 = vunpack.c.l.bf16 %v554
          %v587 = vunpack.c.l.bf16 %v555
          %v588 = vunpack.c.l.bf16 %v556
          %v589 = vunpack.c.l.bf16 %v557
          %v590 = vunpack.c.l.bf16 %v558
          %v591 = vunpack.c.l.bf16 %v559
          %v592 = vunpack.c.l.bf16 %v560
          %v593 = vunpack.c.l.bf16 %v561
          %v594 = vunpack.c.l.bf16 %v562
          %v595 = vunpack.c.l.bf16 %v563
          %v596 = vunpack.c.l.bf16 %v564
          %v597 = vunpack.c.l.bf16 %v565
          %v598 = vunpack.c.l.bf16 %v566
          %v599 = vunpack.c.l.bf16 %v567
          %v600 = vunpack.c.l.bf16 %v568
          %v601 = vunpack.c.l.bf16 %v569
          %v602 = vunpack.c.l.bf16 %v570
          %v603 = vunpack.c.l.bf16 %v571
          %v604 = vunpack.c.l.bf16 %v572
          %v605 = vunpack.c.l.bf16 %v573
          %v606 = vlaneseq
          %v607 = vshrl.u32 %v606, 7
          %v608 = vsub.s32 0, %v607
          %v609 = vrot.slane %v540, %v608
          %611 = vbcast.lane.b32.xlu0 %v609, 256
          %v612 = vpop.permute.xlu0 %611
          %s614 = sor.u32 256, 8
          %615 = vbcast.lane.b32.xlu0 %v609, %s614
          %v616 = vpop.permute.xlu0 %615
          %v617 = vlaneseq
          %v618 = vshrl.u32 %v617, 7
          %v619 = vsub.s32 1, %v618
          %v620 = vrot.slane %v540, %v619
          %622 = vbcast.lane.b32.xlu0 %v620, 256
          %v623 = vpop.permute.xlu0 %622
          %s625 = sor.u32 256, 8
          %626 = vbcast.lane.b32.xlu0 %v620, %s625
          %v627 = vpop.permute.xlu0 %626
          %v628 = vlaneseq
          %v629 = vshrl.u32 %v628, 7
          %v630 = vsub.s32 2, %v629
          %v631 = vrot.slane %v540, %v630
          %633 = vbcast.lane.b32.xlu0 %v631, 256
          %v634 = vpop.permute.xlu0 %633
          %s636 = sor.u32 256, 8
          %637 = vbcast.lane.b32.xlu0 %v631, %s636
          %v638 = vpop.permute.xlu0 %637
          %v639 = vlaneseq
          %v640 = vshrl.u32 %v639, 7
          %v641 = vsub.s32 3, %v640
          %v642 = vrot.slane %v540, %v641
          %644 = vbcast.lane.b32.xlu0 %v642, 256
          %v645 = vpop.permute.xlu0 %644
          %s647 = sor.u32 256, 8
          %648 = vbcast.lane.b32.xlu0 %v642, %s647
          %v649 = vpop.permute.xlu0 %648
          %v650 = vlaneseq
          %v651 = vshrl.u32 %v650, 7
          %v652 = vsub.s32 4, %v651
          %v653 = vrot.slane %v540, %v652
          %655 = vbcast.lane.b32.xlu0 %v653, 256
          %v656 = vpop.permute.xlu0 %655
          %s658 = sor.u32 256, 8
          %659 = vbcast.lane.b32.xlu0 %v653, %s658
          %v660 = vpop.permute.xlu0 %659
          %v661 = vlaneseq
          %v662 = vshrl.u32 %v661, 7
          %v663 = vsub.s32 5, %v662
          %v664 = vrot.slane %v540, %v663
          %666 = vbcast.lane.b32.xlu0 %v664, 256
          %v667 = vpop.permute.xlu0 %666
          %s669 = sor.u32 256, 8
          %670 = vbcast.lane.b32.xlu0 %v664, %s669
          %v671 = vpop.permute.xlu0 %670
          %v672 = vlaneseq
          %v673 = vshrl.u32 %v672, 7
          %v674 = vsub.s32 6, %v673
          %v675 = vrot.slane %v540, %v674
          %677 = vbcast.lane.b32.xlu0 %v675, 256
          %v678 = vpop.permute.xlu0 %677
          %s680 = sor.u32 256, 8
          %681 = vbcast.lane.b32.xlu0 %v675, %s680
          %v682 = vpop.permute.xlu0 %681
          %v683 = vlaneseq
          %v684 = vshrl.u32 %v683, 7
          %v685 = vsub.s32 7, %v684
          %v686 = vrot.slane %v540, %v685
          %688 = vbcast.lane.b32.xlu0 %v686, 256
          %v689 = vpop.permute.xlu0 %688
          %s691 = sor.u32 256, 8
          %692 = vbcast.lane.b32.xlu0 %v686, %s691
          %v693 = vpop.permute.xlu0 %692
          %v694 = vlaneseq
          %v695 = vshrl.u32 %v694, 7
          %v696 = vsub.s32 0, %v695
          %v697 = vrot.slane %v541, %v696
          %699 = vbcast.lane.b32.xlu0 %v697, 256
          %v700 = vpop.permute.xlu0 %699
          %s702 = sor.u32 256, 8
          %703 = vbcast.lane.b32.xlu0 %v697, %s702
          %v704 = vpop.permute.xlu0 %703
          %v705 = vlaneseq
          %v706 = vshrl.u32 %v705, 7
          %v707 = vsub.s32 1, %v706
          %v708 = vrot.slane %v541, %v707
          %710 = vbcast.lane.b32.xlu0 %v708, 256
          %v711 = vpop.permute.xlu0 %710
          %s713 = sor.u32 256, 8
          %714 = vbcast.lane.b32.xlu0 %v708, %s713
          %v715 = vpop.permute.xlu0 %714
          %v716 = vlaneseq
          %v717 = vshrl.u32 %v716, 7
          %v718 = vsub.s32 2, %v717
          %v719 = vrot.slane %v541, %v718
          %721 = vbcast.lane.b32.xlu0 %v719, 256
          %v722 = vpop.permute.xlu0 %721
          %s724 = sor.u32 256, 8
          %725 = vbcast.lane.b32.xlu0 %v719, %s724
          %v726 = vpop.permute.xlu0 %725
          %v727 = vlaneseq
          %v728 = vshrl.u32 %v727, 7
          %v729 = vsub.s32 3, %v728
          %v730 = vrot.slane %v541, %v729
          %732 = vbcast.lane.b32.xlu0 %v730, 256
          %v733 = vpop.permute.xlu0 %732
          %s735 = sor.u32 256, 8
          %736 = vbcast.lane.b32.xlu0 %v730, %s735
          %v737 = vpop.permute.xlu0 %736
          %v738 = vlaneseq
          %v739 = vshrl.u32 %v738, 7
          %v740 = vsub.s32 4, %v739
          %v741 = vrot.slane %v541, %v740
          %743 = vbcast.lane.b32.xlu0 %v741, 256
          %v744 = vpop.permute.xlu0 %743
          %s746 = sor.u32 256, 8
          %747 = vbcast.lane.b32.xlu0 %v741, %s746
          %v748 = vpop.permute.xlu0 %747
          %v749 = vlaneseq
          %v750 = vshrl.u32 %v749, 7
          %v751 = vsub.s32 5, %v750
          %v752 = vrot.slane %v541, %v751
          %754 = vbcast.lane.b32.xlu0 %v752, 256
          %v755 = vpop.permute.xlu0 %754
          %s757 = sor.u32 256, 8
          %758 = vbcast.lane.b32.xlu0 %v752, %s757
          %v759 = vpop.permute.xlu0 %758
          %v760 = vlaneseq
          %v761 = vshrl.u32 %v760, 7
          %v762 = vsub.s32 6, %v761
          %v763 = vrot.slane %v541, %v762
          %765 = vbcast.lane.b32.xlu0 %v763, 256
          %v766 = vpop.permute.xlu0 %765
          %s768 = sor.u32 256, 8
          %769 = vbcast.lane.b32.xlu0 %v763, %s768
          %v770 = vpop.permute.xlu0 %769
          %v771 = vlaneseq
          %v772 = vshrl.u32 %v771, 7
          %v773 = vsub.s32 7, %v772
          %v774 = vrot.slane %v541, %v773
          %776 = vbcast.lane.b32.xlu0 %v774, 256
          %v777 = vpop.permute.xlu0 %776
          %s779 = sor.u32 256, 8
          %780 = vbcast.lane.b32.xlu0 %v774, %s779
          %v781 = vpop.permute.xlu0 %780
          %v782 = vmul.f32 %v574, %v612
          %v783 = vmul.f32 %v575, %v616
          %v784 = vmul.f32 %v576, %v623
          %v785 = vmul.f32 %v577, %v627
          %v786 = vmul.f32 %v578, %v634
          %v787 = vmul.f32 %v579, %v638
          %v788 = vmul.f32 %v580, %v645
          %v789 = vmul.f32 %v581, %v649
          %v790 = vmul.f32 %v582, %v656
          %v791 = vmul.f32 %v583, %v660
          %v792 = vmul.f32 %v584, %v667
          %v793 = vmul.f32 %v585, %v671
          %v794 = vmul.f32 %v586, %v678
          %v795 = vmul.f32 %v587, %v682
          %v796 = vmul.f32 %v588, %v689
          %v797 = vmul.f32 %v589, %v693
          %v798 = vmul.f32 %v590, %v700
          %v799 = vmul.f32 %v591, %v704
          %v800 = vmul.f32 %v592, %v711
          %v801 = vmul.f32 %v593, %v715
          %v802 = vmul.f32 %v594, %v722
          %v803 = vmul.f32 %v595, %v726
          %v804 = vmul.f32 %v596, %v733
          %v805 = vmul.f32 %v597, %v737
          %v806 = vmul.f32 %v598, %v744
          %v807 = vmul.f32 %v599, %v748
          %v808 = vmul.f32 %v600, %v755
          %v809 = vmul.f32 %v601, %v759
          %v810 = vmul.f32 %v602, %v766
          %v811 = vmul.f32 %v603, %v770
          %v812 = vmul.f32 %v604, %v777
          %v813 = vmul.f32 %v605, %v781
          %v814 = vadd.f32 %v782, %v783
          %v815 = vrot.slane %v814, 4
          %v816 = vadd.f32 %v814, %v815
          %v817 = vrot.slane %v816, 2
          %v818 = vadd.f32 %v816, %v817
          %v819 = vrot.slane %v818, 1
          %v820 = vadd.f32 %v818, %v819
          %v821 = vadd.f32 %v784, %v785
          %v822 = vrot.slane %v821, 4
          %v823 = vadd.f32 %v821, %v822
          %v824 = vrot.slane %v823, 2
          %v825 = vadd.f32 %v823, %v824
          %v826 = vrot.slane %v825, 1
          %v827 = vadd.f32 %v825, %v826
          %v828 = vadd.f32 %v786, %v787
          %v829 = vrot.slane %v828, 4
          %v830 = vadd.f32 %v828, %v829
          %v831 = vrot.slane %v830, 2
          %v832 = vadd.f32 %v830, %v831
          %v833 = vrot.slane %v832, 1
          %v834 = vadd.f32 %v832, %v833
          %v835 = vadd.f32 %v788, %v789
          %v836 = vrot.slane %v835, 4
          %v837 = vadd.f32 %v835, %v836
          %v838 = vrot.slane %v837, 2
          %v839 = vadd.f32 %v837, %v838
          %v840 = vrot.slane %v839, 1
          %v841 = vadd.f32 %v839, %v840
          %v842 = vadd.f32 %v790, %v791
          %v843 = vrot.slane %v842, 4
          %v844 = vadd.f32 %v842, %v843
          %v845 = vrot.slane %v844, 2
          %v846 = vadd.f32 %v844, %v845
          %v847 = vrot.slane %v846, 1
          %v848 = vadd.f32 %v846, %v847
          %v849 = vadd.f32 %v792, %v793
          %v850 = vrot.slane %v849, 4
          %v851 = vadd.f32 %v849, %v850
          %v852 = vrot.slane %v851, 2
          %v853 = vadd.f32 %v851, %v852
          %v854 = vrot.slane %v853, 1
          %v855 = vadd.f32 %v853, %v854
          %v856 = vadd.f32 %v794, %v795
          %v857 = vrot.slane %v856, 4
          %v858 = vadd.f32 %v856, %v857
          %v859 = vrot.slane %v858, 2
          %v860 = vadd.f32 %v858, %v859
          %v861 = vrot.slane %v860, 1
          %v862 = vadd.f32 %v860, %v861
          %v863 = vadd.f32 %v796, %v797
          %v864 = vrot.slane %v863, 4
          %v865 = vadd.f32 %v863, %v864
          %v866 = vrot.slane %v865, 2
          %v867 = vadd.f32 %v865, %v866
          %v868 = vrot.slane %v867, 1
          %v869 = vadd.f32 %v867, %v868
          %v870 = vadd.f32 %v798, %v799
          %v871 = vrot.slane %v870, 4
          %v872 = vadd.f32 %v870, %v871
          %v873 = vrot.slane %v872, 2
          %v874 = vadd.f32 %v872, %v873
          %v875 = vrot.slane %v874, 1
          %v876 = vadd.f32 %v874, %v875
          %v877 = vadd.f32 %v800, %v801
          %v878 = vrot.slane %v877, 4
          %v879 = vadd.f32 %v877, %v878
          %v880 = vrot.slane %v879, 2
          %v881 = vadd.f32 %v879, %v880
          %v882 = vrot.slane %v881, 1
          %v883 = vadd.f32 %v881, %v882
          %v884 = vadd.f32 %v802, %v803
          %v885 = vrot.slane %v884, 4
          %v886 = vadd.f32 %v884, %v885
          %v887 = vrot.slane %v886, 2
          %v888 = vadd.f32 %v886, %v887
          %v889 = vrot.slane %v888, 1
          %v890 = vadd.f32 %v888, %v889
          %v891 = vadd.f32 %v804, %v805
          %v892 = vrot.slane %v891, 4
          %v893 = vadd.f32 %v891, %v892
          %v894 = vrot.slane %v893, 2
          %v895 = vadd.f32 %v893, %v894
          %v896 = vrot.slane %v895, 1
          %v897 = vadd.f32 %v895, %v896
          %v898 = vadd.f32 %v806, %v807
          %v899 = vrot.slane %v898, 4
          %v900 = vadd.f32 %v898, %v899
          %v901 = vrot.slane %v900, 2
          %v902 = vadd.f32 %v900, %v901
          %v903 = vrot.slane %v902, 1
          %v904 = vadd.f32 %v902, %v903
          %v905 = vadd.f32 %v808, %v809
          %v906 = vrot.slane %v905, 4
          %v907 = vadd.f32 %v905, %v906
          %v908 = vrot.slane %v907, 2
          %v909 = vadd.f32 %v907, %v908
          %v910 = vrot.slane %v909, 1
          %v911 = vadd.f32 %v909, %v910
          %v912 = vadd.f32 %v810, %v811
          %v913 = vrot.slane %v912, 4
          %v914 = vadd.f32 %v912, %v913
          %v915 = vrot.slane %v914, 2
          %v916 = vadd.f32 %v914, %v915
          %v917 = vrot.slane %v916, 1
          %v918 = vadd.f32 %v916, %v917
          %v919 = vadd.f32 %v812, %v813
          %v920 = vrot.slane %v919, 4
          %v921 = vadd.f32 %v919, %v920
          %v922 = vrot.slane %v921, 2
          %v923 = vadd.f32 %v921, %v922
          %v924 = vrot.slane %v923, 1
          %v925 = vadd.f32 %v923, %v924
          %v926 = vpack.c.bf16 %v820, %v820
          %v927 = vpack.c.bf16 %v827, %v827
          %v928 = vpack.c.bf16 %v834, %v834
          %v929 = vpack.c.bf16 %v841, %v841
          %v930 = vpack.c.bf16 %v848, %v848
          %v931 = vpack.c.bf16 %v855, %v855
          %v932 = vpack.c.bf16 %v862, %v862
          %v933 = vpack.c.bf16 %v869, %v869
          %v934 = vpack.c.bf16 %v876, %v876
          %v935 = vpack.c.bf16 %v883, %v883
          %v936 = vpack.c.bf16 %v890, %v890
          %v937 = vpack.c.bf16 %v897, %v897
          %v938 = vpack.c.bf16 %v904, %v904
          %v939 = vpack.c.bf16 %v911, %v911
          %v940 = vpack.c.bf16 %v918, %v918
          %v941 = vpack.c.bf16 %v925, %v925
          %v942 = vld [vmem:[%s5] sm:$0xf]
          %v943 = vld [vmem:[%s5 + $0x4] sm:$0xf]
          %v944 = vld [vmem:[%s5 + $0x8] sm:$0xf]
          %v945 = vld [vmem:[%s5 + $0xc] sm:$0xf]
          %v946 = vld [vmem:[%s5 + $0x10] sm:$0xf]
          %v947 = vld [vmem:[%s5 + $0x14] sm:$0xf]
          %v948 = vld [vmem:[%s5 + $0x18] sm:$0xf]
          %v949 = vld [vmem:[%s5 + $0x1c] sm:$0xf]
          %v950 = vld [vmem:[%s5 + $0x20] sm:$0xf]
          %v951 = vld [vmem:[%s5 + $0x24] sm:$0xf]
          %v952 = vld [vmem:[%s5 + $0x28] sm:$0xf]
          %v953 = vld [vmem:[%s5 + $0x2c] sm:$0xf]
          %v954 = vld [vmem:[%s5 + $0x30] sm:$0xf]
          %v955 = vld [vmem:[%s5 + $0x34] sm:$0xf]
          %v956 = vld [vmem:[%s5 + $0x38] sm:$0xf]
          %v957 = vld [vmem:[%s5 + $0x3c] sm:$0xf]
          %v958 = vld [vmem:[%s6] sm:$0x1]
          %v960 = vlaneseq
          %v961 = vshrl.u32 %v960, 7
          %v962 = vsub.s32 0, %v961
          %v963 = vrot.slane %v958, %v962
          %v981 = vunpack.c.l.b16 %v926
          %v982 = vunpack.c.l.b16 %v927
          %v983 = vunpack.c.l.b16 %v928
          %v984 = vunpack.c.l.b16 %v929
          %v985 = vunpack.c.l.b16 %v930
          %v986 = vunpack.c.l.b16 %v931
          %v987 = vunpack.c.l.b16 %v932
          %v988 = vunpack.c.l.b16 %v933
          %v989 = vunpack.c.l.b16 %v934
          %v990 = vunpack.c.l.b16 %v935
          %v991 = vunpack.c.l.b16 %v936
          %v992 = vunpack.c.l.b16 %v937
          %v993 = vunpack.c.l.b16 %v938
          %v994 = vunpack.c.l.b16 %v939
          %v995 = vunpack.c.l.b16 %v940
          %v996 = vunpack.c.l.b16 %v941
          %vm997 = vcmask 1041409
          %v998 = vsel %vm997, %v982, %v981
          %vm999 = vcmask 1042434
          %v1000 = vsel %vm999, %v983, %v998
          %vm1001 = vcmask 1043459
          %v1002 = vsel %vm1001, %v984, %v1000
          %vm1003 = vcmask 1044484
          %v1004 = vsel %vm1003, %v985, %v1002
          %vm1005 = vcmask 1045509
          %v1006 = vsel %vm1005, %v986, %v1004
          %vm1007 = vcmask 1046534
          %v1008 = vsel %vm1007, %v987, %v1006
          %vm1009 = vcmask 1047559
          %v1010 = vsel %vm1009, %v988, %v1008
          %v1011 = vsel %vm997, %v990, %v989
          %v1012 = vsel %vm999, %v991, %v1011
          %v1013 = vsel %vm1001, %v992, %v1012
          %v1014 = vsel %vm1003, %v993, %v1013
          %v1015 = vsel %vm1005, %v994, %v1014
          %v1016 = vsel %vm1007, %v995, %v1015
          %v1017 = vsel %vm1009, %v996, %v1016
          %v1018 = vpack.c.b16 %v1017, %v1010
          %v1036 = vunpack.c.l.b16 %v942
          %v1037 = vunpack.c.l.b16 %v943
          %v1038 = vunpack.c.l.b16 %v944
          %v1039 = vunpack.c.l.b16 %v945
          %v1040 = vunpack.c.l.b16 %v946
          %v1041 = vunpack.c.l.b16 %v947
          %v1042 = vunpack.c.l.b16 %v948
          %v1043 = vunpack.c.l.b16 %v949
          %v1044 = vunpack.c.l.b16 %v950
          %v1045 = vunpack.c.l.b16 %v951
          %v1046 = vunpack.c.l.b16 %v952
          %v1047 = vunpack.c.l.b16 %v953
          %v1048 = vunpack.c.l.b16 %v954
          %v1049 = vunpack.c.l.b16 %v955
          %v1050 = vunpack.c.l.b16 %v956
          %v1051 = vunpack.c.l.b16 %v957
          %v1052 = vpack.c.b16 %v1037, %v1036
          %v1053 = vpack.c.b16 %v1039, %v1038
          %v1054 = vpack.c.b16 %v1041, %v1040
          %v1055 = vpack.c.b16 %v1043, %v1042
          %v1056 = vpack.c.b16 %v1045, %v1044
          %v1057 = vpack.c.b16 %v1047, %v1046
          %v1058 = vpack.c.b16 %v1049, %v1048
          %v1059 = vpack.c.b16 %v1051, %v1050
          %1068 = vmatprep.subr.bf16.mxu0 0
          %1069 = vmatpush1.bf16.msra.mxu0 %v1052
          %1070 = vmatprep.subr.bf16.mxu0 0
          %1071 = vmatpush1.bf16.msra.mxu0 %v1053
          %1072 = vmatprep.subr.bf16.mxu0 0
          %1073 = vmatpush1.bf16.msra.mxu0 %v1054
          %1074 = vmatprep.subr.bf16.mxu0 0
          %1075 = vmatpush1.bf16.msra.mxu0 %v1055
          %1076 = vmatprep.subr.bf16.mxu0 0
          %1077 = vmatpush1.bf16.msra.mxu0 %v1056
          %1078 = vmatprep.subr.bf16.mxu0 0
          %1079 = vmatpush1.bf16.msra.mxu0 %v1057
          %1080 = vmatprep.subr.bf16.mxu0 0
          %1081 = vmatpush1.bf16.msra.mxu0 %v1058
          %1082 = vmatprep.subr.bf16.mxu0 0
          %1083 = vmatpush1.bf16.msra.mxu0 %v1059
          %1084 = vmatprep.subr.bf16.mxu0 0
          %1085 = vmatpush1.bf16.msra.mxu0 0
          %1086 = vmatprep.subr.bf16.mxu0 0
          %1087 = vmatpush1.bf16.msra.mxu0 0
          %1088 = vmatprep.subr.bf16.mxu0 0
          %1089 = vmatpush1.bf16.msra.mxu0 0
          %1090 = vmatprep.subr.bf16.mxu0 0
          %1091 = vmatpush1.bf16.msra.mxu0 0
          %1092 = vmatprep.subr.bf16.mxu0 0
          %1093 = vmatpush1.bf16.msra.mxu0 0
          %1094 = vmatprep.subr.bf16.mxu0 0
          %1095 = vmatpush1.bf16.msra.mxu0 0
          %1096 = vmatprep.subr.bf16.mxu0 0
          %1097 = vmatpush1.bf16.msra.mxu0 0
          %1098 = vmatprep.subr.bf16.mxu0 0
          %1099 = vmatpush1.bf16.msra.mxu0 0
          %1100 = vmatprep.mubr.bf16.mxu0 0
          %1101 = vmatmul.mubr.bf16.gmra.mrb[0].mxu0 %v1018
          %v1102 = vpop.f32.mrb[0].mxu0
          %v1103 = vadd.f32 %v963, %v1102
          %v1104 = vpop.f32.mrb[0].mxu0
          %v1105 = vpop.f32.mrb[0].mxu0
          %v1106 = vadd.f32 %v963, %v1105
          %v1107 = vpop.f32.mrb[0].mxu0
          %1108 = vdwg.mxu0
          %v1109 = vmul.f32 %v1103, %v1103
          %v1110 = vmul.f32 %v1106, %v1106
          %1111 = vadd.xlane.f32.xlu0 %v1109
          %v1112 = vpop.xlane.xlu0 %1111
          %1113 = vadd.xlane.f32.xlu0 %v1110
          %v1114 = vpop.xlane.xlu0 %1113
          %v1115 = vmax.f32 %v1112, 1e-24
          %v1116 = vmax.f32 %v1114, 1e-24
          %v1117 = vrsqrt.pop %v1115
          %v1118 = vrsqrt.pop %v1116
          %v1119 = vmul.f32 %v1103, %v1117
          %v1120 = vmul.f32 %v1106, %v1118
          %v1121 = vmul.f32 %v525, %v525
          %v1122 = vmul.f32 %v526, %v526
          %1123 = vadd.xlane.f32.xlu0 %v1121
          %v1124 = vpop.xlane.xlu0 %1123
          %1125 = vadd.xlane.f32.xlu0 %v1122
          %v1126 = vpop.xlane.xlu0 %1125
          %v1127 = vmax.f32 %v1124, 1e-24
          %v1128 = vmax.f32 %v1126, 1e-24
          %v1129 = vrsqrt.pop %v1127
          %v1130 = vrsqrt.pop %v1128
          %v1131 = vmul.f32 %v525, %v1129
          %v1132 = vmul.f32 %v526, %v1130
          %v1133 = vpack.c.bf16 %v1120, %v1119
          %v1134 = vpack.c.bf16 %v1132, %v1131
          %v1135 = vld [vmem:[%s7] sm:$0xf]
          %v1136 = vld [vmem:[%s7 + $0x4] sm:$0xf]
          %v1137 = vld [vmem:[%s7 + $0x8] sm:$0xf]
          %v1138 = vld [vmem:[%s7 + $0xc] sm:$0xf]
          %v1139 = vld [vmem:[%s7 + $0x10] sm:$0xf]
          %v1140 = vld [vmem:[%s7 + $0x14] sm:$0xf]
          %v1141 = vld [vmem:[%s7 + $0x18] sm:$0xf]
          %v1142 = vld [vmem:[%s7 + $0x1c] sm:$0xf]
          %v1143 = vld [vmem:[%s7 + $0x20] sm:$0xf]
          %v1144 = vld [vmem:[%s7 + $0x24] sm:$0xf]
          %v1145 = vld [vmem:[%s7 + $0x28] sm:$0xf]
          %v1146 = vld [vmem:[%s7 + $0x2c] sm:$0xf]
          %v1147 = vld [vmem:[%s7 + $0x30] sm:$0xf]
          %v1148 = vld [vmem:[%s7 + $0x34] sm:$0xf]
          %v1149 = vld [vmem:[%s7 + $0x38] sm:$0xf]
          %v1150 = vld [vmem:[%s7 + $0x3c] sm:$0xf]
          %v1151 = vld [vmem:[%s7 + $0x40] sm:$0xf]
          %v1152 = vld [vmem:[%s7 + $0x44] sm:$0xf]
          %v1153 = vld [vmem:[%s7 + $0x48] sm:$0xf]
          %v1154 = vld [vmem:[%s7 + $0x4c] sm:$0xf]
          %v1155 = vld [vmem:[%s7 + $0x50] sm:$0xf]
          %v1156 = vld [vmem:[%s7 + $0x54] sm:$0xf]
          %v1157 = vld [vmem:[%s7 + $0x58] sm:$0xf]
          %v1158 = vld [vmem:[%s7 + $0x5c] sm:$0xf]
          %v1159 = vld [vmem:[%s7 + $0x60] sm:$0xf]
          %v1160 = vld [vmem:[%s7 + $0x64] sm:$0xf]
          %v1161 = vld [vmem:[%s7 + $0x68] sm:$0xf]
          %v1162 = vld [vmem:[%s7 + $0x6c] sm:$0xf]
          %v1163 = vld [vmem:[%s7 + $0x70] sm:$0xf]
          %v1164 = vld [vmem:[%s7 + $0x74] sm:$0xf]
          %v1165 = vld [vmem:[%s7 + $0x78] sm:$0xf]
          %v1166 = vld [vmem:[%s7 + $0x7c] sm:$0xf]
          %v1167 = vld [vmem:[%s8] sm:$0x1]
          %v1169 = vlaneseq
          %v1170 = vshrl.u32 %v1169, 7
          %v1171 = vsub.s32 0, %v1170
          %v1172 = vrot.slane %v1167, %v1171
          %v1206 = vunpack.c.l.b16 %v1135
          %v1207 = vunpack.c.l.b16 %v1136
          %v1208 = vunpack.c.l.b16 %v1137
          %v1209 = vunpack.c.l.b16 %v1138
          %v1210 = vunpack.c.l.b16 %v1139
          %v1211 = vunpack.c.l.b16 %v1140
          %v1212 = vunpack.c.l.b16 %v1141
          %v1213 = vunpack.c.l.b16 %v1142
          %v1214 = vunpack.c.l.b16 %v1143
          %v1215 = vunpack.c.l.b16 %v1144
          %v1216 = vunpack.c.l.b16 %v1145
          %v1217 = vunpack.c.l.b16 %v1146
          %v1218 = vunpack.c.l.b16 %v1147
          %v1219 = vunpack.c.l.b16 %v1148
          %v1220 = vunpack.c.l.b16 %v1149
          %v1221 = vunpack.c.l.b16 %v1150
          %v1222 = vunpack.c.l.b16 %v1151
          %v1223 = vunpack.c.l.b16 %v1152
          %v1224 = vunpack.c.l.b16 %v1153
          %v1225 = vunpack.c.l.b16 %v1154
          %v1226 = vunpack.c.l.b16 %v1155
          %v1227 = vunpack.c.l.b16 %v1156
          %v1228 = vunpack.c.l.b16 %v1157
          %v1229 = vunpack.c.l.b16 %v1158
          %v1230 = vunpack.c.l.b16 %v1159
          %v1231 = vunpack.c.l.b16 %v1160
          %v1232 = vunpack.c.l.b16 %v1161
          %v1233 = vunpack.c.l.b16 %v1162
          %v1234 = vunpack.c.l.b16 %v1163
          %v1235 = vunpack.c.l.b16 %v1164
          %v1236 = vunpack.c.l.b16 %v1165
          %v1237 = vunpack.c.l.b16 %v1166
          %v1238 = vpack.c.b16 %v1207, %v1206
          %v1239 = vpack.c.b16 %v1209, %v1208
          %v1240 = vpack.c.b16 %v1211, %v1210
          %v1241 = vpack.c.b16 %v1213, %v1212
          %v1242 = vpack.c.b16 %v1215, %v1214
          %v1243 = vpack.c.b16 %v1217, %v1216
          %v1244 = vpack.c.b16 %v1219, %v1218
          %v1245 = vpack.c.b16 %v1221, %v1220
          %v1246 = vpack.c.b16 %v1223, %v1222
          %v1247 = vpack.c.b16 %v1225, %v1224
          %v1248 = vpack.c.b16 %v1227, %v1226
          %v1249 = vpack.c.b16 %v1229, %v1228
          %v1250 = vpack.c.b16 %v1231, %v1230
          %v1251 = vpack.c.b16 %v1233, %v1232
          %v1252 = vpack.c.b16 %v1235, %v1234
          %v1253 = vpack.c.b16 %v1237, %v1236
          %1270 = vmatprep.subr.bf16.mxu0 0
          %1271 = vmatpush1.bf16.msra.mxu0 %v1238
          %1272 = vmatprep.subr.bf16.mxu0 0
          %1273 = vmatpush1.bf16.msra.mxu0 %v1239
          %1274 = vmatprep.subr.bf16.mxu0 0
          %1275 = vmatpush1.bf16.msra.mxu0 %v1240
          %1276 = vmatprep.subr.bf16.mxu0 0
          %1277 = vmatpush1.bf16.msra.mxu0 %v1241
          %1278 = vmatprep.subr.bf16.mxu0 0
          %1279 = vmatpush1.bf16.msra.mxu0 %v1242
          %1280 = vmatprep.subr.bf16.mxu0 0
          %1281 = vmatpush1.bf16.msra.mxu0 %v1243
          %1282 = vmatprep.subr.bf16.mxu0 0
          %1283 = vmatpush1.bf16.msra.mxu0 %v1244
          %1284 = vmatprep.subr.bf16.mxu0 0
          %1285 = vmatpush1.bf16.msra.mxu0 %v1245
          %1286 = vmatprep.subr.bf16.mxu0 0
          %1287 = vmatpush1.bf16.msra.mxu0 %v1246
          %1288 = vmatprep.subr.bf16.mxu0 0
          %1289 = vmatpush1.bf16.msra.mxu0 %v1247
          %1290 = vmatprep.subr.bf16.mxu0 0
          %1291 = vmatpush1.bf16.msra.mxu0 %v1248
          %1292 = vmatprep.subr.bf16.mxu0 0
          %1293 = vmatpush1.bf16.msra.mxu0 %v1249
          %1294 = vmatprep.subr.bf16.mxu0 0
          %1295 = vmatpush1.bf16.msra.mxu0 %v1250
          %1296 = vmatprep.subr.bf16.mxu0 0
          %1297 = vmatpush1.bf16.msra.mxu0 %v1251
          %1298 = vmatprep.subr.bf16.mxu0 0
          %1299 = vmatpush1.bf16.msra.mxu0 %v1252
          %1300 = vmatprep.subr.bf16.mxu0 0
          %1301 = vmatpush1.bf16.msra.mxu0 %v1253
          %1302 = vmatprep.mubr.bf16.mxu0 %v1134
          %1303 = vmatmul.mubr.bf16.gmra.mrb[0].mxu0 %v1133
          %v1304 = vpop.f32.mrb[0].mxu0
          %v1305 = vadd.f32 %v1172, %v1304
          %v1306 = vpop.f32.mrb[0].mxu0
          %v1307 = vpop.f32.mrb[0].mxu0
          %v1308 = vadd.f32 %v1172, %v1307
          %v1309 = vpop.f32.mrb[0].mxu0
          %1310 = vdwg.mxu0
          %1311 = vst [vmem:[#allocation4] sm:$0xff] %v1305
          %1312 = vst [vmem:[#allocation4 + $0x8] sm:$0xff] %v1308
        $region105: #{combine_model_forward.3} parent=92 // pred_fallthru
          _
        // Predicated region
        $region106: #{combine_model_forward.3} parent=92 // pred_check
          %p1313 = pneg %p233
        $region107: #{combine_model_forward.3} parent=92 // pred_check_branch
          %1315 = sbr.rel (%p1313) target = $region109
        $region108: #{combine_model_forward.3} parent=92 // pred_region
          %s1317 = ssub.s32 256, 256
          %1318 = vsyncadd [#allocation5], %s1317
          %s1319 = sshll.u32 [#allocation4], 4
          %s1320 = int_to_ptr.vmem [resolvable:$true] %s1319
          %1325 = dma.vmem_to_hbm [thread:$0]  %s1320, 256, %s9, [#allocation5], 128, 128, 8
        $region109: #{combine_model_forward.3} parent=92 // pred_fallthru
          _
        // Predicated region
        $region110: #{combine_model_forward.3} parent=92 // pred_check
          %p1326 = pneg %p233
        $region111: #{combine_model_forward.3} parent=92 // pred_check_branch
          %1328 = sbr.rel (%p1326) target = $region113
        $region112: #{combine_model_forward.3} parent=92 // pred_region
          %1329 = dma.done [#allocation5], 256
        $region113: #{combine_model_forward.3} parent=92 // pred_fallthru
          _
      $region93: #{combine_model_forward.3} parent=5 // pred_fallthru
        _
      %p1330 = scmp.le.s32.totalorder 2, %s16
      // Predicated region
      $region114: #{combine_model_forward.3} parent=5 // pred_check
        %p1331 = pneg %p1330
      $region115: #{combine_model_forward.3} parent=5 // pred_check_branch
        %1333 = sbr.rel (%p1331) target = $region117
      $region116: #{combine_model_forward.3} parent=5 // pred_region
        %s1334 = ssub.s32 %s16, 2
      $region117: #{combine_model_forward.3} parent=5 // pred_fallthru
        _
    $region6: #{combine_model_forward.3} parent=1 // loop_footer
      %s20 = sadd.s32 1, %s16
    $region7: #{combine_model_forward.3} parent=1 // loop_footer_branch
      %15 = sbr.rel target = $region3
    $region8: #{combine_model_forward.3} parent=1 // loop_exit
      _
    %1335 = vsyncpa [#allocation5], 1
    %s1336 = scalar_lea.sflag [#allocation5], 1
    %1337 = vsyncpa %s1336, 1

</llo_original>
